<compile_context>
chip_gen: v5e
topology: v5e:2x2
jax: 0.10.0
libtpu: 0.0.40
codegen_flags: <defaults>
</compile_context>

<pallas_src>
import jax
import jax.numpy as jnp
from jax.experimental import pallas as pl
from jax.experimental.pallas import tpu as pltpu

D_IN, D_HID, D_OUT = 1536, 512, 128


def _round_up(n, m):
    return ((n + m - 1) // m) * m


def ffn_kernel(x_ref, w1_ref, b1_ref, w2_ref, b2_ref, o_ref):
    # x_ref:  (tm, 1536) bf16   w1_ref: (1536, 512) bf16   b1_ref: (1, 512) f32
    # w2_ref: (512, 128) bf16   b2_ref: (1, 128) f32       o_ref:  (tm, 128)
    h = jnp.dot(x_ref[...], w1_ref[...], preferred_element_type=jnp.float32)
    h = jnp.tanh(h + b1_ref[...])                       # f32 bias-add / tanh
    y = jnp.dot(h.astype(jnp.bfloat16), w2_ref[...],
                preferred_element_type=jnp.float32)
    y = jnp.tanh(y + b2_ref[...])
    o_ref[...] = y.astype(o_ref.dtype)


def ffn_homo_mic(x, w1, b1, w2, b2, *, tm=512):
    """Forward pass of FFN_homo_mic.

    x:  [B, 1536] float32
    w1: [1536, 512], b1: [1, 512], w2: [512, 128], b2: [1, 128]
    Returns [B, 128] with x.dtype.
    """
    B, d_in = x.shape
    assert d_in == D_IN, f"expected feature dim {D_IN}, got {d_in}"

    # Effective batch tile: cap at the 16-row-padded batch (bf16 sublane tile
    # is 16), otherwise use the large default (multiple of 256).
    tm_eff = min(tm, _round_up(B, 16))
    Bp = _round_up(B, tm_eff)

    # Cast matmul operands to bf16 once in the wrapper (halves HBM traffic);
    # biases stay f32 for the f32 epilogue.
    x_bf = x.astype(jnp.bfloat16)
    if Bp != B:
        x_bf = jnp.pad(x_bf, ((0, Bp - B), (0, 0)))
    w1_bf = w1.astype(jnp.bfloat16)
    w2_bf = w2.astype(jnp.bfloat16)
    b1_f32 = b1.astype(jnp.float32)
    b2_f32 = b2.astype(jnp.float32)

    grid = (Bp // tm_eff,)

    bytes_accessed = (
        x_bf.size * 2                      # x (bf16)
        + w1_bf.size * 2 + w2_bf.size * 2  # weights (bf16)
        + b1_f32.size * 4 + b2_f32.size * 4
        + Bp * D_OUT * x.dtype.itemsize    # output
    )
    cost = pl.CostEstimate(
        flops=2 * Bp * (D_IN * D_HID + D_HID * D_OUT),
        transcendentals=Bp * (D_HID + D_OUT),
        bytes_accessed=bytes_accessed,
    )

    out = pl.pallas_call(
        ffn_kernel,
        out_shape=jax.ShapeDtypeStruct((Bp, D_OUT), x.dtype),
        grid_spec=pltpu.PrefetchScalarGridSpec(
            num_scalar_prefetch=0,
            grid=grid,
            in_specs=[
                pl.BlockSpec((tm_eff, D_IN), lambda i: (i, 0)),    # x tile
                pl.BlockSpec((D_IN, D_HID), lambda i: (0, 0)),     # W1 (resident)
                pl.BlockSpec((1, D_HID), lambda i: (0, 0)),        # b1
                pl.BlockSpec((D_HID, D_OUT), lambda i: (0, 0)),    # W2
                pl.BlockSpec((1, D_OUT), lambda i: (0, 0)),        # b2
            ],
            out_specs=pl.BlockSpec((tm_eff, D_OUT), lambda i: (i, 0)),
        ),
        compiler_params=pltpu.CompilerParams(
            dimension_semantics=("parallel",),       # batch axis shards across TCs
            vmem_limit_bytes=48 * 1024 * 1024,       # safe on v7x (64 MiB physical)
        ),
        cost_estimate=cost,
    )(x_bf, w1_bf, b1_f32, w2_bf, b2_f32)

    return out[:B] if Bp != B else out


def init_params(key):
    """Deterministic init matching nn.Linear shapes (weights stored transposed)."""
    k1, k2, k3, k4 = jax.random.split(key, 4)
    lim1 = 1.0 / jnp.sqrt(D_IN)
    lim2 = 1.0 / jnp.sqrt(D_HID)
    w1 = jax.random.uniform(k1, (D_IN, D_HID), jnp.float32, -lim1, lim1)
    b1 = jax.random.uniform(k2, (1, D_HID), jnp.float32, -lim1, lim1)
    w2 = jax.random.uniform(k3, (D_HID, D_OUT), jnp.float32, -lim2, lim2)
    b2 = jax.random.uniform(k4, (1, D_OUT), jnp.float32, -lim2, lim2)
    return w1, b1, w2, b2


def ffn_reference(x, w1, b1, w2, b2):
    h = jnp.tanh(x @ w1 + b1)
    return jnp.tanh(h @ w2 + b2)


if __name__ == "__main__":
    key = jax.random.PRNGKey(0)
    kx, kp = jax.random.split(key)

    B = 8  # small batch; exercises the pad-to-tile path (tm_eff=16)
    x = jax.random.normal(kx, (B, D_IN), jnp.float32)
    w1, b1, w2, b2 = init_params(kp)

    out = ffn_homo_mic(x, w1, b1, w2, b2)
    out = jax.block_until_ready(out)

    ref = ffn_reference(x, w1, b1, w2, b2)
    assert out.shape == (B, D_OUT)
    # bf16 matmul operands with f32 accumulation -> loosened tolerance.
    assert jnp.allclose(out, ref, atol=2e-2, rtol=2e-2), "mismatch vs reference"

    print("KERNEL_OK")
</pallas_src>

<mosaic_0001>
module attributes {stable_mosaic.version = 11 : i64} {
  func.func @ffn_kernel(%arg0: i32, %arg1: memref<16x1536xbf16, #tpu.memory_space<vmem>>, %arg2: memref<1536x512xbf16, #tpu.memory_space<vmem>>, %arg3: memref<1x512xf32, #tpu.memory_space<vmem>>, %arg4: memref<512x128xbf16, #tpu.memory_space<vmem>>, %arg5: memref<1x128xf32, #tpu.memory_space<vmem>>, %arg6: memref<16x128xf32, #tpu.memory_space<vmem>>) attributes {dimension_semantics = [#tpu.dimension_semantics<parallel>], iteration_bounds = array<i64: 1>, scalar_prefetch = 0 : i64, scratch_operands = 0 : i64, tpu.core_type = #tpu.core_type<tc>, window_params = [{transform_indices = @transform_0, window_bounds = array<i64: 16, 1536>}, {pipeline_mode = #tpu.pipeline_mode<synchronous>, transform_indices = @transform_1, window_bounds = array<i64: 1536, 512>}, {pipeline_mode = #tpu.pipeline_mode<synchronous>, transform_indices = @transform_2, window_bounds = array<i64: 1, 512>}, {pipeline_mode = #tpu.pipeline_mode<synchronous>, transform_indices = @transform_3, window_bounds = array<i64: 512, 128>}, {pipeline_mode = #tpu.pipeline_mode<synchronous>, transform_indices = @transform_4, window_bounds = array<i64: 1, 128>}, {transform_indices = @transform_5, window_bounds = array<i64: 16, 128>}]} {
    %c0 = arith.constant 0 : index
    %c0_0 = arith.constant 0 : index
    %0 = vector.load %arg1[%c0, %c0_0] : memref<16x1536xbf16, #tpu.memory_space<vmem>>, vector<16x1536xbf16>
    %c0_1 = arith.constant 0 : index
    %c0_2 = arith.constant 0 : index
    %1 = vector.load %arg2[%c0_1, %c0_2] : memref<1536x512xbf16, #tpu.memory_space<vmem>>, vector<1536x512xbf16>
    %cst = arith.constant dense<0.000000e+00> : vector<16x512xf32>
    %2 = tpu.matmul %0, %1, %cst {dimension_numbers = #tpu.dot_dimension_numbers<[1], [0], [0], [1], [0, 0, 1, 1], [], []>} : vector<16x1536xbf16>, vector<1536x512xbf16>, vector<16x512xf32> -> vector<16x512xf32>
    %c0_3 = arith.constant 0 : index
    %c0_4 = arith.constant 0 : index
    %3 = vector.load %arg3[%c0_3, %c0_4] : memref<1x512xf32, #tpu.memory_space<vmem>>, vector<1x512xf32>
    %4 = vector.broadcast %3 : vector<1x512xf32> to vector<16x512xf32>
    %5 = arith.addf %2, %4 : vector<16x512xf32>
    %6 = math.tanh %5 : vector<16x512xf32>
    %7 = arith.truncf %6 : vector<16x512xf32> to vector<16x512xbf16>
    %c0_5 = arith.constant 0 : index
    %c0_6 = arith.constant 0 : index
    %8 = vector.load %arg4[%c0_5, %c0_6] : memref<512x128xbf16, #tpu.memory_space<vmem>>, vector<512x128xbf16>
    %cst_7 = arith.constant dense<0.000000e+00> : vector<16x128xf32>
    %9 = tpu.matmul %7, %8, %cst_7 {dimension_numbers = #tpu.dot_dimension_numbers<[1], [0], [0], [1], [0, 0, 1, 1], [], []>} : vector<16x512xbf16>, vector<512x128xbf16>, vector<16x128xf32> -> vector<16x128xf32>
    %c0_8 = arith.constant 0 : index
    %c0_9 = arith.constant 0 : index
    %10 = vector.load %arg5[%c0_8, %c0_9] : memref<1x128xf32, #tpu.memory_space<vmem>>, vector<1x128xf32>
    %11 = vector.broadcast %10 : vector<1x128xf32> to vector<16x128xf32>
    %12 = arith.addf %9, %11 : vector<16x128xf32>
    %13 = math.tanh %12 : vector<16x128xf32>
    %c0_10 = arith.constant 0 : index
    %c0_11 = arith.constant 0 : index
    %14 = vector.load %arg6[%c0_10, %c0_11] : memref<16x128xf32, #tpu.memory_space<vmem>>, vector<16x128xf32>
    tpu.vector_store %arg6[%c0_10, %c0_11], %13 {strides = array<i32>} : memref<16x128xf32, #tpu.memory_space<vmem>>, vector<16x128xf32>,
    return
  }
  func.func @transform_0(%arg0: i32) -> (i32, i32) {
    %c0_i32 = arith.constant 0 : i32
    %c0_i32_0 = arith.constant 0 : i32
    return %arg0, %c0_i32 : i32, i32
  }
  func.func @transform_1(%arg0: i32) -> (i32, i32) {
    %c0_i32 = arith.constant 0 : i32
    %c0_i32_0 = arith.constant 0 : i32
    %c0_i32_1 = arith.constant 0 : i32
    return %c0_i32, %c0_i32_0 : i32, i32
  }
  func.func @transform_2(%arg0: i32) -> (i32, i32) {
    %c0_i32 = arith.constant 0 : i32
    %c0_i32_0 = arith.constant 0 : i32
    %c0_i32_1 = arith.constant 0 : i32
    return %c0_i32, %c0_i32_0 : i32, i32
  }
  func.func @transform_3(%arg0: i32) -> (i32, i32) {
    %c0_i32 = arith.constant 0 : i32
    %c0_i32_0 = arith.constant 0 : i32
    %c0_i32_1 = arith.constant 0 : i32
    return %c0_i32, %c0_i32_0 : i32, i32
  }
  func.func @transform_4(%arg0: i32) -> (i32, i32) {
    %c0_i32 = arith.constant 0 : i32
    %c0_i32_0 = arith.constant 0 : i32
    %c0_i32_1 = arith.constant 0 : i32
    return %c0_i32, %c0_i32_0 : i32, i32
  }
  func.func @transform_5(%arg0: i32) -> (i32, i32) {
    %c0_i32 = arith.constant 0 : i32
    %c0_i32_0 = arith.constant 0 : i32
    return %arg0, %c0_i32 : i32, i32
  }
}

</mosaic_0001>

<llo_original>
// kernel: tpu_custom_call.1
$region0: #{tpu_custom_call.1}
  #allocation0 [shape = 'u32[]', space=smem, size = 0x4, offset = 0x4, fixed_abs, tag = 'smem constant byte address 0x4 - core index']
  #allocation1 [shape = 'u32[72,128]{1,0:T(1,128)}', space=vmem, size = 0x9000, scoped, tag = 'internal scratch']
  %s0 = inlined_call_operand.hbm [shape: bf16[16,1536], index: 0, kind: input, shape index: {}]
  %s1 = inlined_call_operand.hbm [shape: bf16[1536,512], index: 1, kind: input, shape index: {}]
  %s2 = inlined_call_operand.hbm [shape: f32[1,512], index: 2, kind: input, shape index: {}]
  %s3 = inlined_call_operand.hbm [shape: bf16[512,128], index: 3, kind: input, shape index: {}]
  %s4 = inlined_call_operand.hbm [shape: f32[1,128], index: 4, kind: input, shape index: {}]
  %s5 = inlined_call_operand.hbm [shape: f32[16,128], index: 5, kind: output, shape index: {}]
  %s6 = sld [smem:[#allocation0]]
  $region50: #{tpu_custom_call.1} parent=0
    _
  %s8 = ssub.s32 1, %s6
  %s9 = scalar_select 0, %s8, %s6
  $region1: #{tpu_custom_call.1} parent=0
    #allocation2 [shape = 'u8[49152]{0}', space=vmem, size = 0xc000, scoped, tag = 'input window, operand 0, single buffered']
    #allocation3 [shape = 's32[1]{0}', space=sflag, size = 0x4, scoped, tag = 'scoped memory for tpu_custom_call.1']
    #allocation4 [shape = 's32[1]{0}', space=sflag, size = 0x4, scoped, tag = 'scoped memory for tpu_custom_call.1']
    #allocation5 [shape = 'u8[1572864]{0}', space=vmem, size = 0x180000, scoped, tag = 'input window, operand 1, single buffered']
    #allocation6 [shape = 's32[1]{0}', space=sflag, size = 0x4, scoped, tag = 'scoped memory for tpu_custom_call.1']
    #allocation7 [shape = 'u8[2048]{0}', space=vmem, size = 0x800, scoped, tag = 'input window, operand 2, single buffered']
    #allocation8 [shape = 'u8[131072]{0}', space=vmem, size = 0x20000, scoped, tag = 'input window, operand 3, single buffered']
    #allocation9 [shape = 's32[1]{0}', space=sflag, size = 0x4, scoped, tag = 'scoped memory for tpu_custom_call.1']
    #allocation10 [shape = 'u8[512]{0}', space=vmem, size = 0x400, scoped, tag = 'input window, operand 4, single buffered']
    #allocation11 [shape = 'u8[8192]{0}', space=vmem, size = 0x2000, scoped, tag = 'output window, operand 0, single buffered']
    %10 = vsyncpa [#allocation3], 0
    %11 = vsyncpa [#allocation6], 0
    %12 = vsyncpa [#allocation9], 0
    %13 = vsyncpa [#allocation4], 0
    // Predicated region
    $region2: #{tpu_custom_call.1} parent=1 // pred_check
      _
    $region3: #{tpu_custom_call.1} parent=1 // pred_check_branch
      %15 = sbr.rel (0) target = $region5
    $region4: #{tpu_custom_call.1} parent=1 // pred_region
      %17 = vsyncadd [#allocation3], 0
      %s18 = sshll.u32 %s0, 4
      %s19 = int_to_ptr.hbm [resolvable:$true] %s18
      %s20 = sshll.u32 [#allocation2], 4
      %s21 = int_to_ptr.vmem [resolvable:$true] %s20
      %26 = dma.hbm_to_vmem [thread:$0]  %s19, 1536, %s21, [#allocation3], 768, 768, 48
    $region5: #{tpu_custom_call.1} parent=1 // pred_fallthru
      _
    // Predicated region
    $region6: #{tpu_custom_call.1} parent=1 // pred_check
      _
    $region7: #{tpu_custom_call.1} parent=1 // pred_check_branch
      %28 = sbr.rel (0) target = $region9
    $region8: #{tpu_custom_call.1} parent=1 // pred_region
      %30 = vsyncadd [#allocation6], 0
      %s31 = sshll.u32 %s1, 4
      %s32 = int_to_ptr.hbm [resolvable:$true] %s31
      %s33 = sshll.u32 [#allocation5], 4
      %s34 = int_to_ptr.vmem [resolvable:$true] %s33
      %39 = dma.hbm_to_vmem [thread:$0]  %s32, 49152, %s34, [#allocation6], 256, 256, 16
    $region9: #{tpu_custom_call.1} parent=1 // pred_fallthru
      _
    // Predicated region
    $region10: #{tpu_custom_call.1} parent=1 // pred_check
      _
    $region11: #{tpu_custom_call.1} parent=1 // pred_check_branch
      %41 = sbr.rel (0) target = $region13
    $region12: #{tpu_custom_call.1} parent=1 // pred_region
      %43 = vsyncadd [#allocation6], 0
      %s45 = sshll.u32 %s2, 4
      %s46 = int_to_ptr.hbm [resolvable:$true] %s45
      %s47 = sshll.u32 [#allocation7], 4
      %s48 = int_to_ptr.vmem [resolvable:$true] %s47
      %50 = dma.hbm_to_vmem [thread:$0]  %s46, 64, %s48, [#allocation6]
    $region13: #{tpu_custom_call.1} parent=1 // pred_fallthru
      _
    // Predicated region
    $region14: #{tpu_custom_call.1} parent=1 // pred_check
      _
    $region15: #{tpu_custom_call.1} parent=1 // pred_check_branch
      %52 = sbr.rel (0) target = $region17
    $region16: #{tpu_custom_call.1} parent=1 // pred_region
      %54 = vsyncadd [#allocation9], 0
      %s55 = sshll.u32 %s3, 4
      %s56 = int_to_ptr.hbm [resolvable:$true] %s55
      %s57 = sshll.u32 [#allocation8], 4
      %s58 = int_to_ptr.vmem [resolvable:$true] %s57
      %63 = dma.hbm_to_vmem [thread:$0]  %s56, 4096, %s58, [#allocation9], 64, 64, 4
    $region17: #{tpu_custom_call.1} parent=1 // pred_fallthru
      _
    // Predicated region
    $region18: #{tpu_custom_call.1} parent=1 // pred_check
      _
    $region19: #{tpu_custom_call.1} parent=1 // pred_check_branch
      %65 = sbr.rel (0) target = $region21
    $region20: #{tpu_custom_call.1} parent=1 // pred_region
      %67 = vsyncadd [#allocation9], 0
      %s69 = sshll.u32 %s4, 4
      %s70 = int_to_ptr.hbm [resolvable:$true] %s69
      %s71 = sshll.u32 [#allocation10], 4
      %s72 = int_to_ptr.vmem [resolvable:$true] %s71
      %74 = dma.hbm_to_vmem [thread:$0]  %s70, 16, %s72, [#allocation9]
    $region21: #{tpu_custom_call.1} parent=1 // pred_fallthru
      _
    // Predicated region
    $region22: #{tpu_custom_call.1} parent=1 // pred_check
      _
    $region23: #{tpu_custom_call.1} parent=1 // pred_check_branch
      %76 = sbr.rel (0) target = $region25
    $region24: #{tpu_custom_call.1} parent=1 // pred_region
      %78 = dma.done [#allocation3], 1536
    $region25: #{tpu_custom_call.1} parent=1 // pred_fallthru
      _
    // Predicated region
    $region26: #{tpu_custom_call.1} parent=1 // pred_check
      _
    $region27: #{tpu_custom_call.1} parent=1 // pred_check_branch
      %80 = sbr.rel (0) target = $region29
    $region28: #{tpu_custom_call.1} parent=1 // pred_region
      %82 = dma.done [#allocation6], 49152
    $region29: #{tpu_custom_call.1} parent=1 // pred_fallthru
      _
    // Predicated region
    $region30: #{tpu_custom_call.1} parent=1 // pred_check
      _
    $region31: #{tpu_custom_call.1} parent=1 // pred_check_branch
      %84 = sbr.rel (0) target = $region33
    $region32: #{tpu_custom_call.1} parent=1 // pred_region
      %86 = dma.done [#allocation6], 64
    $region33: #{tpu_custom_call.1} parent=1 // pred_fallthru
      _
    // Predicated region
    $region34: #{tpu_custom_call.1} parent=1 // pred_check
      _
    $region35: #{tpu_custom_call.1} parent=1 // pred_check_branch
      %88 = sbr.rel (0) target = $region37
    $region36: #{tpu_custom_call.1} parent=1 // pred_region
      %90 = dma.done [#allocation9], 4096
    $region37: #{tpu_custom_call.1} parent=1 // pred_fallthru
      _
    // Predicated region
    $region38: #{tpu_custom_call.1} parent=1 // pred_check
      _
    $region39: #{tpu_custom_call.1} parent=1 // pred_check_branch
      %92 = sbr.rel (0) target = $region41
    $region40: #{tpu_custom_call.1} parent=1 // pred_region
      %94 = dma.done [#allocation9], 16
    $region41: #{tpu_custom_call.1} parent=1 // pred_fallthru
      _
    %v95 = vld [vmem:[#allocation2] sm:$0xff]
    %v96 = vld [vmem:[#allocation2 + $0x8] sm:$0xff]
    %v97 = vld [vmem:[#allocation2 + $0x10] sm:$0xff]
    %v98 = vld [vmem:[#allocation2 + $0x18] sm:$0xff]
    %v99 = vld [vmem:[#allocation2 + $0x20] sm:$0xff]
    %v100 = vld [vmem:[#allocation2 + $0x28] sm:$0xff]
    %v101 = vld [vmem:[#allocation2 + $0x30] sm:$0xff]
    %v102 = vld [vmem:[#allocation2 + $0x38] sm:$0xff]
    %v103 = vld [vmem:[#allocation2 + $0x40] sm:$0xff]
    %v104 = vld [vmem:[#allocation2 + $0x48] sm:$0xff]
    %v105 = vld [vmem:[#allocation2 + $0x50] sm:$0xff]
    %v106 = vld [vmem:[#allocation2 + $0x58] sm:$0xff]
    %v107 = vld [vmem:[#allocation5] sm:$0xff]
    %v108 = vld [vmem:[#allocation5 + $0x8] sm:$0xff]
    %v109 = vld [vmem:[#allocation5 + $0x10] sm:$0xff]
    %v110 = vld [vmem:[#allocation5 + $0x18] sm:$0xff]
    %v111 = vld [vmem:[#allocation5 + $0x20] sm:$0xff]
    %v112 = vld [vmem:[#allocation5 + $0x28] sm:$0xff]
    %v113 = vld [vmem:[#allocation5 + $0x30] sm:$0xff]
    %v114 = vld [vmem:[#allocation5 + $0x38] sm:$0xff]
    %v115 = vld [vmem:[#allocation5 + $0x40] sm:$0xff]
    %v116 = vld [vmem:[#allocation5 + $0x48] sm:$0xff]
    %v117 = vld [vmem:[#allocation5 + $0x50] sm:$0xff]
    %v118 = vld [vmem:[#allocation5 + $0x58] sm:$0xff]
    %v119 = vld [vmem:[#allocation5 + $0x60] sm:$0xff]
    %v120 = vld [vmem:[#allocation5 + $0x68] sm:$0xff]
    %v121 = vld [vmem:[#allocation5 + $0x70] sm:$0xff]
    %v122 = vld [vmem:[#allocation5 + $0x78] sm:$0xff]
    %v123 = vld [vmem:[#allocation5 + $0x80] sm:$0xff]
    %v124 = vld [vmem:[#allocation5 + $0x88] sm:$0xff]
    %v125 = vld [vmem:[#allocation5 + $0x90] sm:$0xff]
    %v126 = vld [vmem:[#allocation5 + $0x98] sm:$0xff]
    %v127 = vld [vmem:[#allocation5 + $0xa0] sm:$0xff]
    %v128 = vld [vmem:[#allocation5 + $0xa8] sm:$0xff]
    %v129 = vld [vmem:[#allocation5 + $0xb0] sm:$0xff]
    %v130 = vld [vmem:[#allocation5 + $0xb8] sm:$0xff]
    %v131 = vld [vmem:[#allocation5 + $0xc0] sm:$0xff]
    %v132 = vld [vmem:[#allocation5 + $0xc8] sm:$0xff]
    %v133 = vld [vmem:[#allocation5 + $0xd0] sm:$0xff]
    %v134 = vld [vmem:[#allocation5 + $0xd8] sm:$0xff]
    %v135 = vld [vmem:[#allocation5 + $0xe0] sm:$0xff]
    %v136 = vld [vmem:[#allocation5 + $0xe8] sm:$0xff]
    %v137 = vld [vmem:[#allocation5 + $0xf0] sm:$0xff]
    %v138 = vld [vmem:[#allocation5 + $0xf8] sm:$0xff]
    %v139 = vld [vmem:[#allocation5 + $0x100] sm:$0xff]
    %v140 = vld [vmem:[#allocation5 + $0x108] sm:$0xff]
    %v141 = vld [vmem:[#allocation5 + $0x110] sm:$0xff]
    %v142 = vld [vmem:[#allocation5 + $0x118] sm:$0xff]
    %v143 = vld [vmem:[#allocation5 + $0x120] sm:$0xff]
    %v144 = vld [vmem:[#allocation5 + $0x128] sm:$0xff]
    %v145 = vld [vmem:[#allocation5 + $0x130] sm:$0xff]
    %v146 = vld [vmem:[#allocation5 + $0x138] sm:$0xff]
    %v147 = vld [vmem:[#allocation5 + $0x140] sm:$0xff]
    %v148 = vld [vmem:[#allocation5 + $0x148] sm:$0xff]
    %v149 = vld [vmem:[#allocation5 + $0x150] sm:$0xff]
    %v150 = vld [vmem:[#allocation5 + $0x158] sm:$0xff]
    %v151 = vld [vmem:[#allocation5 + $0x160] sm:$0xff]
    %v152 = vld [vmem:[#allocation5 + $0x168] sm:$0xff]
    %v153 = vld [vmem:[#allocation5 + $0x170] sm:$0xff]
    %v154 = vld [vmem:[#allocation5 + $0x178] sm:$0xff]
    %v155 = vld [vmem:[#allocation5 + $0x180] sm:$0xff]
    %v156 = vld [vmem:[#allocation5 + $0x188] sm:$0xff]
    %v157 = vld [vmem:[#allocation5 + $0x190] sm:$0xff]
    %v158 = vld [vmem:[#allocation5 + $0x198] sm:$0xff]
    %v159 = vld [vmem:[#allocation5 + $0x1a0] sm:$0xff]
    %v160 = vld [vmem:[#allocation5 + $0x1a8] sm:$0xff]
    %v161 = vld [vmem:[#allocation5 + $0x1b0] sm:$0xff]
    %v162 = vld [vmem:[#allocation5 + $0x1b8] sm:$0xff]
    %v163 = vld [vmem:[#allocation5 + $0x1c0] sm:$0xff]
    %v164 = vld [vmem:[#allocation5 + $0x1c8] sm:$0xff]
    %v165 = vld [vmem:[#allocation5 + $0x1d0] sm:$0xff]
    %v166 = vld [vmem:[#allocation5 + $0x1d8] sm:$0xff]
    %v167 = vld [vmem:[#allocation5 + $0x1e0] sm:$0xff]
    %v168 = vld [vmem:[#allocation5 + $0x1e8] sm:$0xff]
    %v169 = vld [vmem:[#allocation5 + $0x1f0] sm:$0xff]
    %v170 = vld [vmem:[#allocation5 + $0x1f8] sm:$0xff]
    %v171 = vld [vmem:[#allocation5 + $0x200] sm:$0xff]
    %v172 = vld [vmem:[#allocation5 + $0x208] sm:$0xff]
    %v173 = vld [vmem:[#allocation5 + $0x210] sm:$0xff]
    %v174 = vld [vmem:[#allocation5 + $0x218] sm:$0xff]
    %v175 = vld [vmem:[#allocation5 + $0x220] sm:$0xff]
    %v176 = vld [vmem:[#allocation5 + $0x228] sm:$0xff]
    %v177 = vld [vmem:[#allocation5 + $0x230] sm:$0xff]
    %v178 = vld [vmem:[#allocation5 + $0x238] sm:$0xff]
    %v179 = vld [vmem:[#allocation5 + $0x240] sm:$0xff]
    %v180 = vld [vmem:[#allocation5 + $0x248] sm:$0xff]
    %v181 = vld [vmem:[#allocation5 + $0x250] sm:$0xff]
    %v182 = vld [vmem:[#allocation5 + $0x258] sm:$0xff]
    %v183 = vld [vmem:[#allocation5 + $0x260] sm:$0xff]
    %v184 = vld [vmem:[#allocation5 + $0x268] sm:$0xff]
    %v185 = vld [vmem:[#allocation5 + $0x270] sm:$0xff]
    %v186 = vld [vmem:[#allocation5 + $0x278] sm:$0xff]
    %v187 = vld [vmem:[#allocation5 + $0x280] sm:$0xff]
    %v188 = vld [vmem:[#allocation5 + $0x288] sm:$0xff]
    %v189 = vld [vmem:[#allocation5 + $0x290] sm:$0xff]
    %v190 = vld [vmem:[#allocation5 + $0x298] sm:$0xff]
    %v191 = vld [vmem:[#allocation5 + $0x2a0] sm:$0xff]
    %v192 = vld [vmem:[#allocation5 + $0x2a8] sm:$0xff]
    %v193 = vld [vmem:[#allocation5 + $0x2b0] sm:$0xff]
    %v194 = vld [vmem:[#allocation5 + $0x2b8] sm:$0xff]
    %v195 = vld [vmem:[#allocation5 + $0x2c0] sm:$0xff]
    %v196 = vld [vmem:[#allocation5 + $0x2c8] sm:$0xff]
    %v197 = vld [vmem:[#allocation5 + $0x2d0] sm:$0xff]
    %v198 = vld [vmem:[#allocation5 + $0x2d8] sm:$0xff]
    %v199 = vld [vmem:[#allocation5 + $0x2e0] sm:$0xff]
    %v200 = vld [vmem:[#allocation5 + $0x2e8] sm:$0xff]
    %v201 = vld [vmem:[#allocation5 + $0x2f0] sm:$0xff]
    %v202 = vld [vmem:[#allocation5 + $0x2f8] sm:$0xff]
    %v203 = vld [vmem:[#allocation5 + $0x300] sm:$0xff]
    %v204 = vld [vmem:[#allocation5 + $0x308] sm:$0xff]
    %v205 = vld [vmem:[#allocation5 + $0x310] sm:$0xff]
    %v206 = vld [vmem:[#allocation5 + $0x318] sm:$0xff]
    %v207 = vld [vmem:[#allocation5 + $0x320] sm:$0xff]
    %v208 = vld [vmem:[#allocation5 + $0x328] sm:$0xff]
    %v209 = vld [vmem:[#allocation5 + $0x330] sm:$0xff]
    %v210 = vld [vmem:[#allocation5 + $0x338] sm:$0xff]
    %v211 = vld [vmem:[#allocation5 + $0x340] sm:$0xff]
    %v212 = vld [vmem:[#allocation5 + $0x348] sm:$0xff]
    %v213 = vld [vmem:[#allocation5 + $0x350] sm:$0xff]
    %v214 = vld [vmem:[#allocation5 + $0x358] sm:$0xff]
    %v215 = vld [vmem:[#allocation5 + $0x360] sm:$0xff]
    %v216 = vld [vmem:[#allocation5 + $0x368] sm:$0xff]
    %v217 = vld [vmem:[#allocation5 + $0x370] sm:$0xff]
    %v218 = vld [vmem:[#allocation5 + $0x378] sm:$0xff]
    %v219 = vld [vmem:[#allocation5 + $0x380] sm:$0xff]
    %v220 = vld [vmem:[#allocation5 + $0x388] sm:$0xff]
    %v221 = vld [vmem:[#allocation5 + $0x390] sm:$0xff]
    %v222 = vld [vmem:[#allocation5 + $0x398] sm:$0xff]
    %v223 = vld [vmem:[#allocation5 + $0x3a0] sm:$0xff]
    %v224 = vld [vmem:[#allocation5 + $0x3a8] sm:$0xff]
    %v225 = vld [vmem:[#allocation5 + $0x3b0] sm:$0xff]
    %v226 = vld [vmem:[#allocation5 + $0x3b8] sm:$0xff]
    %v227 = vld [vmem:[#allocation5 + $0x3c0] sm:$0xff]
    %v228 = vld [vmem:[#allocation5 + $0x3c8] sm:$0xff]
    %v229 = vld [vmem:[#allocation5 + $0x3d0] sm:$0xff]
    %v230 = vld [vmem:[#allocation5 + $0x3d8] sm:$0xff]
    %v231 = vld [vmem:[#allocation5 + $0x3e0] sm:$0xff]
    %v232 = vld [vmem:[#allocation5 + $0x3e8] sm:$0xff]
    %v233 = vld [vmem:[#allocation5 + $0x3f0] sm:$0xff]
    %v234 = vld [vmem:[#allocation5 + $0x3f8] sm:$0xff]
    %v235 = vld [vmem:[#allocation5 + $0x400] sm:$0xff]
    %v236 = vld [vmem:[#allocation5 + $0x408] sm:$0xff]
    %v237 = vld [vmem:[#allocation5 + $0x410] sm:$0xff]
    %v238 = vld [vmem:[#allocation5 + $0x418] sm:$0xff]
    %v239 = vld [vmem:[#allocation5 + $0x420] sm:$0xff]
    %v240 = vld [vmem:[#allocation5 + $0x428] sm:$0xff]
    %v241 = vld [vmem:[#allocation5 + $0x430] sm:$0xff]
    %v242 = vld [vmem:[#allocation5 + $0x438] sm:$0xff]
    %v243 = vld [vmem:[#allocation5 + $0x440] sm:$0xff]
    %v244 = vld [vmem:[#allocation5 + $0x448] sm:$0xff]
    %v245 = vld [vmem:[#allocation5 + $0x450] sm:$0xff]
    %v246 = vld [vmem:[#allocation5 + $0x458] sm:$0xff]
    %v247 = vld [vmem:[#allocation5 + $0x460] sm:$0xff]
    %v248 = vld [vmem:[#allocation5 + $0x468] sm:$0xff]
    %v249 = vld [vmem:[#allocation5 + $0x470] sm:$0xff]
    %v250 = vld [vmem:[#allocation5 + $0x478] sm:$0xff]
    %v251 = vld [vmem:[#allocation5 + $0x480] sm:$0xff]
    %v252 = vld [vmem:[#allocation5 + $0x488] sm:$0xff]
    %v253 = vld [vmem:[#allocation5 + $0x490] sm:$0xff]
    %v254 = vld [vmem:[#allocation5 + $0x498] sm:$0xff]
    %v255 = vld [vmem:[#allocation5 + $0x4a0] sm:$0xff]
    %v256 = vld [vmem:[#allocation5 + $0x4a8] sm:$0xff]
    %v257 = vld [vmem:[#allocation5 + $0x4b0] sm:$0xff]
    %v258 = vld [vmem:[#allocation5 + $0x4b8] sm:$0xff]
    %v259 = vld [vmem:[#allocation5 + $0x4c0] sm:$0xff]
    %v260 = vld [vmem:[#allocation5 + $0x4c8] sm:$0xff]
    %v261 = vld [vmem:[#allocation5 + $0x4d0] sm:$0xff]
    %v262 = vld [vmem:[#allocation5 + $0x4d8] sm:$0xff]
    %v263 = vld [vmem:[#allocation5 + $0x4e0] sm:$0xff]
    %v264 = vld [vmem:[#allocation5 + $0x4e8] sm:$0xff]
    %v265 = vld [vmem:[#allocation5 + $0x4f0] sm:$0xff]
    %v266 = vld [vmem:[#allocation5 + $0x4f8] sm:$0xff]
    %v267 = vld [vmem:[#allocation5 + $0x500] sm:$0xff]
    %v268 = vld [vmem:[#allocation5 + $0x508] sm:$0xff]
    %v269 = vld [vmem:[#allocation5 + $0x510] sm:$0xff]
    %v270 = vld [vmem:[#allocation5 + $0x518] sm:$0xff]
    %v271 = vld [vmem:[#allocation5 + $0x520] sm:$0xff]
    %v272 = vld [vmem:[#allocation5 + $0x528] sm:$0xff]
    %v273 = vld [vmem:[#allocation5 + $0x530] sm:$0xff]
    %v274 = vld [vmem:[#allocation5 + $0x538] sm:$0xff]
    %v275 = vld [vmem:[#allocation5 + $0x540] sm:$0xff]
    %v276 = vld [vmem:[#allocation5 + $0x548] sm:$0xff]
    %v277 = vld [vmem:[#allocation5 + $0x550] sm:$0xff]
    %v278 = vld [vmem:[#allocation5 + $0x558] sm:$0xff]
    %v279 = vld [vmem:[#allocation5 + $0x560] sm:$0xff]
    %v280 = vld [vmem:[#allocation5 + $0x568] sm:$0xff]
    %v281 = vld [vmem:[#allocation5 + $0x570] sm:$0xff]
    %v282 = vld [vmem:[#allocation5 + $0x578] sm:$0xff]
    %v283 = vld [vmem:[#allocation5 + $0x580] sm:$0xff]
    %v284 = vld [vmem:[#allocation5 + $0x588] sm:$0xff]
    %v285 = vld [vmem:[#allocation5 + $0x590] sm:$0xff]
    %v286 = vld [vmem:[#allocation5 + $0x598] sm:$0xff]
    %v287 = vld [vmem:[#allocation5 + $0x5a0] sm:$0xff]
    %v288 = vld [vmem:[#allocation5 + $0x5a8] sm:$0xff]
    %v289 = vld [vmem:[#allocation5 + $0x5b0] sm:$0xff]
    %v290 = vld [vmem:[#allocation5 + $0x5b8] sm:$0xff]
    %v291 = vld [vmem:[#allocation5 + $0x5c0] sm:$0xff]
    %v292 = vld [vmem:[#allocation5 + $0x5c8] sm:$0xff]
    %v293 = vld [vmem:[#allocation5 + $0x5d0] sm:$0xff]
    %v294 = vld [vmem:[#allocation5 + $0x5d8] sm:$0xff]
    %v295 = vld [vmem:[#allocation5 + $0x5e0] sm:$0xff]
    %v296 = vld [vmem:[#allocation5 + $0x5e8] sm:$0xff]
    %v297 = vld [vmem:[#allocation5 + $0x5f0] sm:$0xff]
    %v298 = vld [vmem:[#allocation5 + $0x5f8] sm:$0xff]
    %v299 = vld [vmem:[#allocation5 + $0x600] sm:$0xff]
    %v300 = vld [vmem:[#allocation5 + $0x608] sm:$0xff]
    %v301 = vld [vmem:[#allocation5 + $0x610] sm:$0xff]
    %v302 = vld [vmem:[#allocation5 + $0x618] sm:$0xff]
    %v303 = vld [vmem:[#allocation5 + $0x620] sm:$0xff]
    %v304 = vld [vmem:[#allocation5 + $0x628] sm:$0xff]
    %v305 = vld [vmem:[#allocation5 + $0x630] sm:$0xff]
    %v306 = vld [vmem:[#allocation5 + $0x638] sm:$0xff]
    %v307 = vld [vmem:[#allocation5 + $0x640] sm:$0xff]
    %v308 = vld [vmem:[#allocation5 + $0x648] sm:$0xff]
    %v309 = vld [vmem:[#allocation5 + $0x650] sm:$0xff]
    %v310 = vld [vmem:[#allocation5 + $0x658] sm:$0xff]
    %v311 = vld [vmem:[#allocation5 + $0x660] sm:$0xff]
    %v312 = vld [vmem:[#allocation5 + $0x668] sm:$0xff]
    %v313 = vld [vmem:[#allocation5 + $0x670] sm:$0xff]
    %v314 = vld [vmem:[#allocation5 + $0x678] sm:$0xff]
    %v315 = vld [vmem:[#allocation5 + $0x680] sm:$0xff]
    %v316 = vld [vmem:[#allocation5 + $0x688] sm:$0xff]
    %v317 = vld [vmem:[#allocation5 + $0x690] sm:$0xff]
    %v318 = vld [vmem:[#allocation5 + $0x698] sm:$0xff]
    %v319 = vld [vmem:[#allocation5 + $0x6a0] sm:$0xff]
    %v320 = vld [vmem:[#allocation5 + $0x6a8] sm:$0xff]
    %v321 = vld [vmem:[#allocation5 + $0x6b0] sm:$0xff]
    %v322 = vld [vmem:[#allocation5 + $0x6b8] sm:$0xff]
    %v323 = vld [vmem:[#allocation5 + $0x6c0] sm:$0xff]
    %v324 = vld [vmem:[#allocation5 + $0x6c8] sm:$0xff]
    %v325 = vld [vmem:[#allocation5 + $0x6d0] sm:$0xff]
    %v326 = vld [vmem:[#allocation5 + $0x6d8] sm:$0xff]
    %v327 = vld [vmem:[#allocation5 + $0x6e0] sm:$0xff]
    %v328 = vld [vmem:[#allocation5 + $0x6e8] sm:$0xff]
    %v329 = vld [vmem:[#allocation5 + $0x6f0] sm:$0xff]
    %v330 = vld [vmem:[#allocation5 + $0x6f8] sm:$0xff]
    %v331 = vld [vmem:[#allocation5 + $0x700] sm:$0xff]
    %v332 = vld [vmem:[#allocation5 + $0x708] sm:$0xff]
    %v333 = vld [vmem:[#allocation5 + $0x710] sm:$0xff]
    %v334 = vld [vmem:[#allocation5 + $0x718] sm:$0xff]
    %v335 = vld [vmem:[#allocation5 + $0x720] sm:$0xff]
    %v336 = vld [vmem:[#allocation5 + $0x728] sm:$0xff]
    %v337 = vld [vmem:[#allocation5 + $0x730] sm:$0xff]
    %v338 = vld [vmem:[#allocation5 + $0x738] sm:$0xff]
    %v339 = vld [vmem:[#allocation5 + $0x740] sm:$0xff]
    %v340 = vld [vmem:[#allocation5 + $0x748] sm:$0xff]
    %v341 = vld [vmem:[#allocation5 + $0x750] sm:$0xff]
    %v342 = vld [vmem:[#allocation5 + $0x758] sm:$0xff]
    %v343 = vld [vmem:[#allocation5 + $0x760] sm:$0xff]
    %v344 = vld [vmem:[#allocation5 + $0x768] sm:$0xff]
    %v345 = vld [vmem:[#allocation5 + $0x770] sm:$0xff]
    %v346 = vld [vmem:[#allocation5 + $0x778] sm:$0xff]
    %v347 = vld [vmem:[#allocation5 + $0x780] sm:$0xff]
    %v348 = vld [vmem:[#allocation5 + $0x788] sm:$0xff]
    %v349 = vld [vmem:[#allocation5 + $0x790] sm:$0xff]
    %v350 = vld [vmem:[#allocation5 + $0x798] sm:$0xff]
    %v351 = vld [vmem:[#allocation5 + $0x7a0] sm:$0xff]
    %v352 = vld [vmem:[#allocation5 + $0x7a8] sm:$0xff]
    %v353 = vld [vmem:[#allocation5 + $0x7b0] sm:$0xff]
    %v354 = vld [vmem:[#allocation5 + $0x7b8] sm:$0xff]
    %v355 = vld [vmem:[#allocation5 + $0x7c0] sm:$0xff]
    %v356 = vld [vmem:[#allocation5 + $0x7c8] sm:$0xff]
    %v357 = vld [vmem:[#allocation5 + $0x7d0] sm:$0xff]
    %v358 = vld [vmem:[#allocation5 + $0x7d8] sm:$0xff]
    %v359 = vld [vmem:[#allocation5 + $0x7e0] sm:$0xff]
    %v360 = vld [vmem:[#allocation5 + $0x7e8] sm:$0xff]
    %v361 = vld [vmem:[#allocation5 + $0x7f0] sm:$0xff]
    %v362 = vld [vmem:[#allocation5 + $0x7f8] sm:$0xff]
    %v363 = vld [vmem:[#allocation5 + $0x800] sm:$0xff]
    %v364 = vld [vmem:[#allocation5 + $0x808] sm:$0xff]
    %v365 = vld [vmem:[#allocation5 + $0x810] sm:$0xff]
    %v366 = vld [vmem:[#allocation5 + $0x818] sm:$0xff]
    %v367 = vld [vmem:[#allocation5 + $0x820] sm:$0xff]
    %v368 = vld [vmem:[#allocation5 + $0x828] sm:$0xff]
    %v369 = vld [vmem:[#allocation5 + $0x830] sm:$0xff]
    %v370 = vld [vmem:[#allocation5 + $0x838] sm:$0xff]
    %v371 = vld [vmem:[#allocation5 + $0x840] sm:$0xff]
    %v372 = vld [vmem:[#allocation5 + $0x848] sm:$0xff]
    %v373 = vld [vmem:[#allocation5 + $0x850] sm:$0xff]
    %v374 = vld [vmem:[#allocation5 + $0x858] sm:$0xff]
    %v375 = vld [vmem:[#allocation5 + $0x860] sm:$0xff]
    %v376 = vld [vmem:[#allocation5 + $0x868] sm:$0xff]
    %v377 = vld [vmem:[#allocation5 + $0x870] sm:$0xff]
    %v378 = vld [vmem:[#allocation5 + $0x878] sm:$0xff]
    %v379 = vld [vmem:[#allocation5 + $0x880] sm:$0xff]
    %v380 = vld [vmem:[#allocation5 + $0x888] sm:$0xff]
    %v381 = vld [vmem:[#allocation5 + $0x890] sm:$0xff]
    %v382 = vld [vmem:[#allocation5 + $0x898] sm:$0xff]
    %v383 = vld [vmem:[#allocation5 + $0x8a0] sm:$0xff]
    %v384 = vld [vmem:[#allocation5 + $0x8a8] sm:$0xff]
    %v385 = vld [vmem:[#allocation5 + $0x8b0] sm:$0xff]
    %v386 = vld [vmem:[#allocation5 + $0x8b8] sm:$0xff]
    %v387 = vld [vmem:[#allocation5 + $0x8c0] sm:$0xff]
    %v388 = vld [vmem:[#allocation5 + $0x8c8] sm:$0xff]
    %v389 = vld [vmem:[#allocation5 + $0x8d0] sm:$0xff]
    %v390 = vld [vmem:[#allocation5 + $0x8d8] sm:$0xff]
    %v391 = vld [vmem:[#allocation5 + $0x8e0] sm:$0xff]
    %v392 = vld [vmem:[#allocation5 + $0x8e8] sm:$0xff]
    %v393 = vld [vmem:[#allocation5 + $0x8f0] sm:$0xff]
    %v394 = vld [vmem:[#allocation5 + $0x8f8] sm:$0xff]
    %v395 = vld [vmem:[#allocation5 + $0x900] sm:$0xff]
    %v396 = vld [vmem:[#allocation5 + $0x908] sm:$0xff]
    %v397 = vld [vmem:[#allocation5 + $0x910] sm:$0xff]
    %v398 = vld [vmem:[#allocation5 + $0x918] sm:$0xff]
    %v399 = vld [vmem:[#allocation5 + $0x920] sm:$0xff]
    %v400 = vld [vmem:[#allocation5 + $0x928] sm:$0xff]
    %v401 = vld [vmem:[#allocation5 + $0x930] sm:$0xff]
    %v402 = vld [vmem:[#allocation5 + $0x938] sm:$0xff]
    %v403 = vld [vmem:[#allocation5 + $0x940] sm:$0xff]
    %v404 = vld [vmem:[#allocation5 + $0x948] sm:$0xff]
    %v405 = vld [vmem:[#allocation5 + $0x950] sm:$0xff]
    %v406 = vld [vmem:[#allocation5 + $0x958] sm:$0xff]
    %v407 = vld [vmem:[#allocation5 + $0x960] sm:$0xff]
    %v408 = vld [vmem:[#allocation5 + $0x968] sm:$0xff]
    %v409 = vld [vmem:[#allocation5 + $0x970] sm:$0xff]
    %v410 = vld [vmem:[#allocation5 + $0x978] sm:$0xff]
    %v411 = vld [vmem:[#allocation5 + $0x980] sm:$0xff]
    %v412 = vld [vmem:[#allocation5 + $0x988] sm:$0xff]
    %v413 = vld [vmem:[#allocation5 + $0x990] sm:$0xff]
    %v414 = vld [vmem:[#allocation5 + $0x998] sm:$0xff]
    %v415 = vld [vmem:[#allocation5 + $0x9a0] sm:$0xff]
    %v416 = vld [vmem:[#allocation5 + $0x9a8] sm:$0xff]
    %v417 = vld [vmem:[#allocation5 + $0x9b0] sm:$0xff]
    %v418 = vld [vmem:[#allocation5 + $0x9b8] sm:$0xff]
    %v419 = vld [vmem:[#allocation5 + $0x9c0] sm:$0xff]
    %v420 = vld [vmem:[#allocation5 + $0x9c8] sm:$0xff]
    %v421 = vld [vmem:[#allocation5 + $0x9d0] sm:$0xff]
    %v422 = vld [vmem:[#allocation5 + $0x9d8] sm:$0xff]
    %v423 = vld [vmem:[#allocation5 + $0x9e0] sm:$0xff]
    %v424 = vld [vmem:[#allocation5 + $0x9e8] sm:$0xff]
    %v425 = vld [vmem:[#allocation5 + $0x9f0] sm:$0xff]
    %v426 = vld [vmem:[#allocation5 + $0x9f8] sm:$0xff]
    %v427 = vld [vmem:[#allocation5 + $0xa00] sm:$0xff]
    %v428 = vld [vmem:[#allocation5 + $0xa08] sm:$0xff]
    %v429 = vld [vmem:[#allocation5 + $0xa10] sm:$0xff]
    %v430 = vld [vmem:[#allocation5 + $0xa18] sm:$0xff]
    %v431 = vld [vmem:[#allocation5 + $0xa20] sm:$0xff]
    %v432 = vld [vmem:[#allocation5 + $0xa28] sm:$0xff]
    %v433 = vld [vmem:[#allocation5 + $0xa30] sm:$0xff]
    %v434 = vld [vmem:[#allocation5 + $0xa38] sm:$0xff]
    %v435 = vld [vmem:[#allocation5 + $0xa40] sm:$0xff]
    %v436 = vld [vmem:[#allocation5 + $0xa48] sm:$0xff]
    %v437 = vld [vmem:[#allocation5 + $0xa50] sm:$0xff]
    %v438 = vld [vmem:[#allocation5 + $0xa58] sm:$0xff]
    %v439 = vld [vmem:[#allocation5 + $0xa60] sm:$0xff]
    %v440 = vld [vmem:[#allocation5 + $0xa68] sm:$0xff]
    %v441 = vld [vmem:[#allocation5 + $0xa70] sm:$0xff]
    %v442 = vld [vmem:[#allocation5 + $0xa78] sm:$0xff]
    %v443 = vld [vmem:[#allocation5 + $0xa80] sm:$0xff]
    %v444 = vld [vmem:[#allocation5 + $0xa88] sm:$0xff]
    %v445 = vld [vmem:[#allocation5 + $0xa90] sm:$0xff]
    %v446 = vld [vmem:[#allocation5 + $0xa98] sm:$0xff]
    %v447 = vld [vmem:[#allocation5 + $0xaa0] sm:$0xff]
    %v448 = vld [vmem:[#allocation5 + $0xaa8] sm:$0xff]
    %v449 = vld [vmem:[#allocation5 + $0xab0] sm:$0xff]
    %v450 = vld [vmem:[#allocation5 + $0xab8] sm:$0xff]
    %v451 = vld [vmem:[#allocation5 + $0xac0] sm:$0xff]
    %v452 = vld [vmem:[#allocation5 + $0xac8] sm:$0xff]
    %v453 = vld [vmem:[#allocation5 + $0xad0] sm:$0xff]
    %v454 = vld [vmem:[#allocation5 + $0xad8] sm:$0xff]
    %v455 = vld [vmem:[#allocation5 + $0xae0] sm:$0xff]
    %v456 = vld [vmem:[#allocation5 + $0xae8] sm:$0xff]
    %v457 = vld [vmem:[#allocation5 + $0xaf0] sm:$0xff]
    %v458 = vld [vmem:[#allocation5 + $0xaf8] sm:$0xff]
    %v459 = vld [vmem:[#allocation5 + $0xb00] sm:$0xff]
    %v460 = vld [vmem:[#allocation5 + $0xb08] sm:$0xff]
    %v461 = vld [vmem:[#allocation5 + $0xb10] sm:$0xff]
    %v462 = vld [vmem:[#allocation5 + $0xb18] sm:$0xff]
    %v463 = vld [vmem:[#allocation5 + $0xb20] sm:$0xff]
    %v464 = vld [vmem:[#allocation5 + $0xb28] sm:$0xff]
    %v465 = vld [vmem:[#allocation5 + $0xb30] sm:$0xff]
    %v466 = vld [vmem:[#allocation5 + $0xb38] sm:$0xff]
    %v467 = vld [vmem:[#allocation5 + $0xb40] sm:$0xff]
    %v468 = vld [vmem:[#allocation5 + $0xb48] sm:$0xff]
    %v469 = vld [vmem:[#allocation5 + $0xb50] sm:$0xff]
    %v470 = vld [vmem:[#allocation5 + $0xb58] sm:$0xff]
    %v471 = vld [vmem:[#allocation5 + $0xb60] sm:$0xff]
    %v472 = vld [vmem:[#allocation5 + $0xb68] sm:$0xff]
    %v473 = vld [vmem:[#allocation5 + $0xb70] sm:$0xff]
    %v474 = vld [vmem:[#allocation5 + $0xb78] sm:$0xff]
    %v475 = vld [vmem:[#allocation5 + $0xb80] sm:$0xff]
    %v476 = vld [vmem:[#allocation5 + $0xb88] sm:$0xff]
    %v477 = vld [vmem:[#allocation5 + $0xb90] sm:$0xff]
    %v478 = vld [vmem:[#allocation5 + $0xb98] sm:$0xff]
    %v479 = vld [vmem:[#allocation5 + $0xba0] sm:$0xff]
    %v480 = vld [vmem:[#allocation5 + $0xba8] sm:$0xff]
    %v481 = vld [vmem:[#allocation5 + $0xbb0] sm:$0xff]
    %v482 = vld [vmem:[#allocation5 + $0xbb8] sm:$0xff]
    %v483 = vld [vmem:[#allocation5 + $0xbc0] sm:$0xff]
    %v484 = vld [vmem:[#allocation5 + $0xbc8] sm:$0xff]
    %v485 = vld [vmem:[#allocation5 + $0xbd0] sm:$0xff]
    %v486 = vld [vmem:[#allocation5 + $0xbd8] sm:$0xff]
    %v487 = vld [vmem:[#allocation5 + $0xbe0] sm:$0xff]
    %v488 = vld [vmem:[#allocation5 + $0xbe8] sm:$0xff]
    %v489 = vld [vmem:[#allocation5 + $0xbf0] sm:$0xff]
    %v490 = vld [vmem:[#allocation5 + $0xbf8] sm:$0xff]
    %v491 = vld [vmem:[#allocation7] sm:$0xf]
    %v493 = vperm.slane %v491, 0
    %v494 = vperm.slane %v491, 1
    %v495 = vperm.slane %v491, 2
    %v496 = vperm.slane %v491, 3
    %v513 = vunpack.c.l.b16 %v95
    %v514 = vunpack.c.h.b16 %v95
    %v515 = vunpack.c.l.b16 %v96
    %v516 = vunpack.c.h.b16 %v96
    %v517 = vunpack.c.l.b16 %v97
    %v518 = vunpack.c.h.b16 %v97
    %v519 = vunpack.c.l.b16 %v98
    %v520 = vunpack.c.h.b16 %v98
    %v521 = vunpack.c.l.b16 %v99
    %v522 = vunpack.c.h.b16 %v99
    %v523 = vunpack.c.l.b16 %v100
    %v524 = vunpack.c.h.b16 %v100
    %v525 = vunpack.c.l.b16 %v101
    %v526 = vunpack.c.h.b16 %v101
    %v527 = vunpack.c.l.b16 %v102
    %v528 = vunpack.c.h.b16 %v102
    %v529 = vunpack.c.l.b16 %v103
    %v530 = vunpack.c.h.b16 %v103
    %v531 = vunpack.c.l.b16 %v104
    %v532 = vunpack.c.h.b16 %v104
    %v533 = vunpack.c.l.b16 %v105
    %v534 = vunpack.c.h.b16 %v105
    %v535 = vunpack.c.l.b16 %v106
    %v536 = vunpack.c.h.b16 %v106
    %v537 = vpack.c.b16 %v525, %v513
    %v538 = vpack.c.b16 %v526, %v514
    %v539 = vpack.c.b16 %v527, %v515
    %v540 = vpack.c.b16 %v528, %v516
    %v541 = vpack.c.b16 %v529, %v517
    %v542 = vpack.c.b16 %v530, %v518
    %v543 = vpack.c.b16 %v531, %v519
    %v544 = vpack.c.b16 %v532, %v520
    %v545 = vpack.c.b16 %v533, %v521
    %v546 = vpack.c.b16 %v534, %v522
    %v547 = vpack.c.b16 %v535, %v523
    %v548 = vpack.c.b16 %v536, %v524
    %v945 = vunpack.c.l.b16 %v107
    %v946 = vunpack.c.h.b16 %v107
    %v947 = vunpack.c.l.b16 %v108
    %v948 = vunpack.c.h.b16 %v108
    %v949 = vunpack.c.l.b16 %v109
    %v950 = vunpack.c.h.b16 %v109
    %v951 = vunpack.c.l.b16 %v110
    %v952 = vunpack.c.h.b16 %v110
    %v953 = vunpack.c.l.b16 %v111
    %v954 = vunpack.c.h.b16 %v111
    %v955 = vunpack.c.l.b16 %v112
    %v956 = vunpack.c.h.b16 %v112
    %v957 = vunpack.c.l.b16 %v113
    %v958 = vunpack.c.h.b16 %v113
    %v959 = vunpack.c.l.b16 %v114
    %v960 = vunpack.c.h.b16 %v114
    %v961 = vunpack.c.l.b16 %v115
    %v962 = vunpack.c.h.b16 %v115
    %v963 = vunpack.c.l.b16 %v116
    %v964 = vunpack.c.h.b16 %v116
    %v965 = vunpack.c.l.b16 %v117
    %v966 = vunpack.c.h.b16 %v117
    %v967 = vunpack.c.l.b16 %v118
    %v968 = vunpack.c.h.b16 %v118
    %v969 = vunpack.c.l.b16 %v119
    %v970 = vunpack.c.h.b16 %v119
    %v971 = vunpack.c.l.b16 %v120
    %v972 = vunpack.c.h.b16 %v120
    %v973 = vunpack.c.l.b16 %v121
    %v974 = vunpack.c.h.b16 %v121
    %v975 = vunpack.c.l.b16 %v122
    %v976 = vunpack.c.h.b16 %v122
    %v977 = vunpack.c.l.b16 %v123
    %v978 = vunpack.c.h.b16 %v123
    %v979 = vunpack.c.l.b16 %v124
    %v980 = vunpack.c.h.b16 %v124
    %v981 = vunpack.c.l.b16 %v125
    %v982 = vunpack.c.h.b16 %v125
    %v983 = vunpack.c.l.b16 %v126
    %v984 = vunpack.c.h.b16 %v126
    %v985 = vunpack.c.l.b16 %v127
    %v986 = vunpack.c.h.b16 %v127
    %v987 = vunpack.c.l.b16 %v128
    %v988 = vunpack.c.h.b16 %v128
    %v989 = vunpack.c.l.b16 %v129
    %v990 = vunpack.c.h.b16 %v129
    %v991 = vunpack.c.l.b16 %v130
    %v992 = vunpack.c.h.b16 %v130
    %v993 = vunpack.c.l.b16 %v131
    %v994 = vunpack.c.h.b16 %v131
    %v995 = vunpack.c.l.b16 %v132
    %v996 = vunpack.c.h.b16 %v132
    %v997 = vunpack.c.l.b16 %v133
    %v998 = vunpack.c.h.b16 %v133
    %v999 = vunpack.c.l.b16 %v134
    %v1000 = vunpack.c.h.b16 %v134
    %v1001 = vunpack.c.l.b16 %v135
    %v1002 = vunpack.c.h.b16 %v135
    %v1003 = vunpack.c.l.b16 %v136
    %v1004 = vunpack.c.h.b16 %v136
    %v1005 = vunpack.c.l.b16 %v137
    %v1006 = vunpack.c.h.b16 %v137
    %v1007 = vunpack.c.l.b16 %v138
    %v1008 = vunpack.c.h.b16 %v138
    %v1009 = vunpack.c.l.b16 %v139
    %v1010 = vunpack.c.h.b16 %v139
    %v1011 = vunpack.c.l.b16 %v140
    %v1012 = vunpack.c.h.b16 %v140
    %v1013 = vunpack.c.l.b16 %v141
    %v1014 = vunpack.c.h.b16 %v141
    %v1015 = vunpack.c.l.b16 %v142
    %v1016 = vunpack.c.h.b16 %v142
    %v1017 = vunpack.c.l.b16 %v143
    %v1018 = vunpack.c.h.b16 %v143
    %v1019 = vunpack.c.l.b16 %v144
    %v1020 = vunpack.c.h.b16 %v144
    %v1021 = vunpack.c.l.b16 %v145
    %v1022 = vunpack.c.h.b16 %v145
    %v1023 = vunpack.c.l.b16 %v146
    %v1024 = vunpack.c.h.b16 %v146
    %v1025 = vunpack.c.l.b16 %v147
    %v1026 = vunpack.c.h.b16 %v147
    %v1027 = vunpack.c.l.b16 %v148
    %v1028 = vunpack.c.h.b16 %v148
    %v1029 = vunpack.c.l.b16 %v149
    %v1030 = vunpack.c.h.b16 %v149
    %v1031 = vunpack.c.l.b16 %v150
    %v1032 = vunpack.c.h.b16 %v150
    %v1033 = vunpack.c.l.b16 %v151
    %v1034 = vunpack.c.h.b16 %v151
    %v1035 = vunpack.c.l.b16 %v152
    %v1036 = vunpack.c.h.b16 %v152
    %v1037 = vunpack.c.l.b16 %v153
    %v1038 = vunpack.c.h.b16 %v153
    %v1039 = vunpack.c.l.b16 %v154
    %v1040 = vunpack.c.h.b16 %v154
    %v1041 = vunpack.c.l.b16 %v155
    %v1042 = vunpack.c.h.b16 %v155
    %v1043 = vunpack.c.l.b16 %v156
    %v1044 = vunpack.c.h.b16 %v156
    %v1045 = vunpack.c.l.b16 %v157
    %v1046 = vunpack.c.h.b16 %v157
    %v1047 = vunpack.c.l.b16 %v158
    %v1048 = vunpack.c.h.b16 %v158
    %v1049 = vunpack.c.l.b16 %v159
    %v1050 = vunpack.c.h.b16 %v159
    %v1051 = vunpack.c.l.b16 %v160
    %v1052 = vunpack.c.h.b16 %v160
    %v1053 = vunpack.c.l.b16 %v161
    %v1054 = vunpack.c.h.b16 %v161
    %v1055 = vunpack.c.l.b16 %v162
    %v1056 = vunpack.c.h.b16 %v162
    %v1057 = vunpack.c.l.b16 %v163
    %v1058 = vunpack.c.h.b16 %v163
    %v1059 = vunpack.c.l.b16 %v164
    %v1060 = vunpack.c.h.b16 %v164
    %v1061 = vunpack.c.l.b16 %v165
    %v1062 = vunpack.c.h.b16 %v165
    %v1063 = vunpack.c.l.b16 %v166
    %v1064 = vunpack.c.h.b16 %v166
    %v1065 = vunpack.c.l.b16 %v167
    %v1066 = vunpack.c.h.b16 %v167
    %v1067 = vunpack.c.l.b16 %v168
    %v1068 = vunpack.c.h.b16 %v168
    %v1069 = vunpack.c.l.b16 %v169
    %v1070 = vunpack.c.h.b16 %v169
    %v1071 = vunpack.c.l.b16 %v170
    %v1072 = vunpack.c.h.b16 %v170
    %v1073 = vunpack.c.l.b16 %v171
    %v1074 = vunpack.c.h.b16 %v171
    %v1075 = vunpack.c.l.b16 %v172
    %v1076 = vunpack.c.h.b16 %v172
    %v1077 = vunpack.c.l.b16 %v173
    %v1078 = vunpack.c.h.b16 %v173
    %v1079 = vunpack.c.l.b16 %v174
    %v1080 = vunpack.c.h.b16 %v174
    %v1081 = vunpack.c.l.b16 %v175
    %v1082 = vunpack.c.h.b16 %v175
    %v1083 = vunpack.c.l.b16 %v176
    %v1084 = vunpack.c.h.b16 %v176
    %v1085 = vunpack.c.l.b16 %v177
    %v1086 = vunpack.c.h.b16 %v177
    %v1087 = vunpack.c.l.b16 %v178
    %v1088 = vunpack.c.h.b16 %v178
    %v1089 = vunpack.c.l.b16 %v179
    %v1090 = vunpack.c.h.b16 %v179
    %v1091 = vunpack.c.l.b16 %v180
    %v1092 = vunpack.c.h.b16 %v180
    %v1093 = vunpack.c.l.b16 %v181
    %v1094 = vunpack.c.h.b16 %v181
    %v1095 = vunpack.c.l.b16 %v182
    %v1096 = vunpack.c.h.b16 %v182
    %v1097 = vunpack.c.l.b16 %v183
    %v1098 = vunpack.c.h.b16 %v183
    %v1099 = vunpack.c.l.b16 %v184
    %v1100 = vunpack.c.h.b16 %v184
    %v1101 = vunpack.c.l.b16 %v185
    %v1102 = vunpack.c.h.b16 %v185
    %v1103 = vunpack.c.l.b16 %v186
    %v1104 = vunpack.c.h.b16 %v186
    %v1105 = vunpack.c.l.b16 %v187
    %v1106 = vunpack.c.h.b16 %v187
    %v1107 = vunpack.c.l.b16 %v188
    %v1108 = vunpack.c.h.b16 %v188
    %v1109 = vunpack.c.l.b16 %v189
    %v1110 = vunpack.c.h.b16 %v189
    %v1111 = vunpack.c.l.b16 %v190
    %v1112 = vunpack.c.h.b16 %v190
    %v1113 = vunpack.c.l.b16 %v191
    %v1114 = vunpack.c.h.b16 %v191
    %v1115 = vunpack.c.l.b16 %v192
    %v1116 = vunpack.c.h.b16 %v192
    %v1117 = vunpack.c.l.b16 %v193
    %v1118 = vunpack.c.h.b16 %v193
    %v1119 = vunpack.c.l.b16 %v194
    %v1120 = vunpack.c.h.b16 %v194
    %v1121 = vunpack.c.l.b16 %v195
    %v1122 = vunpack.c.h.b16 %v195
    %v1123 = vunpack.c.l.b16 %v196
    %v1124 = vunpack.c.h.b16 %v196
    %v1125 = vunpack.c.l.b16 %v197
    %v1126 = vunpack.c.h.b16 %v197
    %v1127 = vunpack.c.l.b16 %v198
    %v1128 = vunpack.c.h.b16 %v198
    %v1129 = vunpack.c.l.b16 %v199
    %v1130 = vunpack.c.h.b16 %v199
    %v1131 = vunpack.c.l.b16 %v200
    %v1132 = vunpack.c.h.b16 %v200
    %v1133 = vunpack.c.l.b16 %v201
    %v1134 = vunpack.c.h.b16 %v201
    %v1135 = vunpack.c.l.b16 %v202
    %v1136 = vunpack.c.h.b16 %v202
    %v1137 = vunpack.c.l.b16 %v203
    %v1138 = vunpack.c.h.b16 %v203
    %v1139 = vunpack.c.l.b16 %v204
    %v1140 = vunpack.c.h.b16 %v204
    %v1141 = vunpack.c.l.b16 %v205
    %v1142 = vunpack.c.h.b16 %v205
    %v1143 = vunpack.c.l.b16 %v206
    %v1144 = vunpack.c.h.b16 %v206
    %v1145 = vunpack.c.l.b16 %v207
    %v1146 = vunpack.c.h.b16 %v207
    %v1147 = vunpack.c.l.b16 %v208
    %v1148 = vunpack.c.h.b16 %v208
    %v1149 = vunpack.c.l.b16 %v209
    %v1150 = vunpack.c.h.b16 %v209
    %v1151 = vunpack.c.l.b16 %v210
    %v1152 = vunpack.c.h.b16 %v210
    %v1153 = vunpack.c.l.b16 %v211
    %v1154 = vunpack.c.h.b16 %v211
    %v1155 = vunpack.c.l.b16 %v212
    %v1156 = vunpack.c.h.b16 %v212
    %v1157 = vunpack.c.l.b16 %v213
    %v1158 = vunpack.c.h.b16 %v213
    %v1159 = vunpack.c.l.b16 %v214
    %v1160 = vunpack.c.h.b16 %v214
    %v1161 = vunpack.c.l.b16 %v215
    %v1162 = vunpack.c.h.b16 %v215
    %v1163 = vunpack.c.l.b16 %v216
    %v1164 = vunpack.c.h.b16 %v216
    %v1165 = vunpack.c.l.b16 %v217
    %v1166 = vunpack.c.h.b16 %v217
    %v1167 = vunpack.c.l.b16 %v218
    %v1168 = vunpack.c.h.b16 %v218
    %v1169 = vunpack.c.l.b16 %v219
    %v1170 = vunpack.c.h.b16 %v219
    %v1171 = vunpack.c.l.b16 %v220
    %v1172 = vunpack.c.h.b16 %v220
    %v1173 = vunpack.c.l.b16 %v221
    %v1174 = vunpack.c.h.b16 %v221
    %v1175 = vunpack.c.l.b16 %v222
    %v1176 = vunpack.c.h.b16 %v222
    %v1177 = vunpack.c.l.b16 %v223
    %v1178 = vunpack.c.h.b16 %v223
    %v1179 = vunpack.c.l.b16 %v224
    %v1180 = vunpack.c.h.b16 %v224
    %v1181 = vunpack.c.l.b16 %v225
    %v1182 = vunpack.c.h.b16 %v225
    %v1183 = vunpack.c.l.b16 %v226
    %v1184 = vunpack.c.h.b16 %v226
    %v1185 = vunpack.c.l.b16 %v227
    %v1186 = vunpack.c.h.b16 %v227
    %v1187 = vunpack.c.l.b16 %v228
    %v1188 = vunpack.c.h.b16 %v228
    %v1189 = vunpack.c.l.b16 %v229
    %v1190 = vunpack.c.h.b16 %v229
    %v1191 = vunpack.c.l.b16 %v230
    %v1192 = vunpack.c.h.b16 %v230
    %v1193 = vunpack.c.l.b16 %v231
    %v1194 = vunpack.c.h.b16 %v231
    %v1195 = vunpack.c.l.b16 %v232
    %v1196 = vunpack.c.h.b16 %v232
    %v1197 = vunpack.c.l.b16 %v233
    %v1198 = vunpack.c.h.b16 %v233
    %v1199 = vunpack.c.l.b16 %v234
    %v1200 = vunpack.c.h.b16 %v234
    %v1201 = vunpack.c.l.b16 %v235
    %v1202 = vunpack.c.h.b16 %v235
    %v1203 = vunpack.c.l.b16 %v236
    %v1204 = vunpack.c.h.b16 %v236
    %v1205 = vunpack.c.l.b16 %v237
    %v1206 = vunpack.c.h.b16 %v237
    %v1207 = vunpack.c.l.b16 %v238
    %v1208 = vunpack.c.h.b16 %v238
    %v1209 = vunpack.c.l.b16 %v239
    %v1210 = vunpack.c.h.b16 %v239
    %v1211 = vunpack.c.l.b16 %v240
    %v1212 = vunpack.c.h.b16 %v240
    %v1213 = vunpack.c.l.b16 %v241
    %v1214 = vunpack.c.h.b16 %v241
    %v1215 = vunpack.c.l.b16 %v242
    %v1216 = vunpack.c.h.b16 %v242
    %v1217 = vunpack.c.l.b16 %v243
    %v1218 = vunpack.c.h.b16 %v243
    %v1219 = vunpack.c.l.b16 %v244
    %v1220 = vunpack.c.h.b16 %v244
    %v1221 = vunpack.c.l.b16 %v245
    %v1222 = vunpack.c.h.b16 %v245
    %v1223 = vunpack.c.l.b16 %v246
    %v1224 = vunpack.c.h.b16 %v246
    %v1225 = vunpack.c.l.b16 %v247
    %v1226 = vunpack.c.h.b16 %v247
    %v1227 = vunpack.c.l.b16 %v248
    %v1228 = vunpack.c.h.b16 %v248
    %v1229 = vunpack.c.l.b16 %v249
    %v1230 = vunpack.c.h.b16 %v249
    %v1231 = vunpack.c.l.b16 %v250
    %v1232 = vunpack.c.h.b16 %v250
    %v1233 = vunpack.c.l.b16 %v251
    %v1234 = vunpack.c.h.b16 %v251
    %v1235 = vunpack.c.l.b16 %v252
    %v1236 = vunpack.c.h.b16 %v252
    %v1237 = vunpack.c.l.b16 %v253
    %v1238 = vunpack.c.h.b16 %v253
    %v1239 = vunpack.c.l.b16 %v254
    %v1240 = vunpack.c.h.b16 %v254
    %v1241 = vunpack.c.l.b16 %v255
    %v1242 = vunpack.c.h.b16 %v255
    %v1243 = vunpack.c.l.b16 %v256
    %v1244 = vunpack.c.h.b16 %v256
    %v1245 = vunpack.c.l.b16 %v257
    %v1246 = vunpack.c.h.b16 %v257
    %v1247 = vunpack.c.l.b16 %v258
    %v1248 = vunpack.c.h.b16 %v258
    %v1249 = vunpack.c.l.b16 %v259
    %v1250 = vunpack.c.h.b16 %v259
    %v1251 = vunpack.c.l.b16 %v260
    %v1252 = vunpack.c.h.b16 %v260
    %v1253 = vunpack.c.l.b16 %v261
    %v1254 = vunpack.c.h.b16 %v261
    %v1255 = vunpack.c.l.b16 %v262
    %v1256 = vunpack.c.h.b16 %v262
    %v1257 = vunpack.c.l.b16 %v263
    %v1258 = vunpack.c.h.b16 %v263
    %v1259 = vunpack.c.l.b16 %v264
    %v1260 = vunpack.c.h.b16 %v264
    %v1261 = vunpack.c.l.b16 %v265
    %v1262 = vunpack.c.h.b16 %v265
    %v1263 = vunpack.c.l.b16 %v266
    %v1264 = vunpack.c.h.b16 %v266
    %v1265 = vunpack.c.l.b16 %v267
    %v1266 = vunpack.c.h.b16 %v267
    %v1267 = vunpack.c.l.b16 %v268
    %v1268 = vunpack.c.h.b16 %v268
    %v1269 = vunpack.c.l.b16 %v269
    %v1270 = vunpack.c.h.b16 %v269
    %v1271 = vunpack.c.l.b16 %v270
    %v1272 = vunpack.c.h.b16 %v270
    %v1273 = vunpack.c.l.b16 %v271
    %v1274 = vunpack.c.h.b16 %v271
    %v1275 = vunpack.c.l.b16 %v272
    %v1276 = vunpack.c.h.b16 %v272
    %v1277 = vunpack.c.l.b16 %v273
    %v1278 = vunpack.c.h.b16 %v273
    %v1279 = vunpack.c.l.b16 %v274
    %v1280 = vunpack.c.h.b16 %v274
    %v1281 = vunpack.c.l.b16 %v275
    %v1282 = vunpack.c.h.b16 %v275
    %v1283 = vunpack.c.l.b16 %v276
    %v1284 = vunpack.c.h.b16 %v276
    %v1285 = vunpack.c.l.b16 %v277
    %v1286 = vunpack.c.h.b16 %v277
    %v1287 = vunpack.c.l.b16 %v278
    %v1288 = vunpack.c.h.b16 %v278
    %v1289 = vunpack.c.l.b16 %v279
    %v1290 = vunpack.c.h.b16 %v279
    %v1291 = vunpack.c.l.b16 %v280
    %v1292 = vunpack.c.h.b16 %v280
    %v1293 = vunpack.c.l.b16 %v281
    %v1294 = vunpack.c.h.b16 %v281
    %v1295 = vunpack.c.l.b16 %v282
    %v1296 = vunpack.c.h.b16 %v282
    %v1297 = vunpack.c.l.b16 %v283
    %v1298 = vunpack.c.h.b16 %v283
    %v1299 = vunpack.c.l.b16 %v284
    %v1300 = vunpack.c.h.b16 %v284
    %v1301 = vunpack.c.l.b16 %v285
    %v1302 = vunpack.c.h.b16 %v285
    %v1303 = vunpack.c.l.b16 %v286
    %v1304 = vunpack.c.h.b16 %v286
    %v1305 = vunpack.c.l.b16 %v287
    %v1306 = vunpack.c.h.b16 %v287
    %v1307 = vunpack.c.l.b16 %v288
    %v1308 = vunpack.c.h.b16 %v288
    %v1309 = vunpack.c.l.b16 %v289
    %v1310 = vunpack.c.h.b16 %v289
    %v1311 = vunpack.c.l.b16 %v290
    %v1312 = vunpack.c.h.b16 %v290
    %v1313 = vunpack.c.l.b16 %v291
    %v1314 = vunpack.c.h.b16 %v291
    %v1315 = vunpack.c.l.b16 %v292
    %v1316 = vunpack.c.h.b16 %v292
    %v1317 = vunpack.c.l.b16 %v293
    %v1318 = vunpack.c.h.b16 %v293
    %v1319 = vunpack.c.l.b16 %v294
    %v1320 = vunpack.c.h.b16 %v294
    %v1321 = vunpack.c.l.b16 %v295
    %v1322 = vunpack.c.h.b16 %v295
    %v1323 = vunpack.c.l.b16 %v296
    %v1324 = vunpack.c.h.b16 %v296
    %v1325 = vunpack.c.l.b16 %v297
    %v1326 = vunpack.c.h.b16 %v297
    %v1327 = vunpack.c.l.b16 %v298
    %v1328 = vunpack.c.h.b16 %v298
    %v1329 = vunpack.c.l.b16 %v299
    %v1330 = vunpack.c.h.b16 %v299
    %v1331 = vunpack.c.l.b16 %v300
    %v1332 = vunpack.c.h.b16 %v300
    %v1333 = vunpack.c.l.b16 %v301
    %v1334 = vunpack.c.h.b16 %v301
    %v1335 = vunpack.c.l.b16 %v302
    %v1336 = vunpack.c.h.b16 %v302
    %v1337 = vunpack.c.l.b16 %v303
    %v1338 = vunpack.c.h.b16 %v303
    %v1339 = vunpack.c.l.b16 %v304
    %v1340 = vunpack.c.h.b16 %v304
    %v1341 = vunpack.c.l.b16 %v305
    %v1342 = vunpack.c.h.b16 %v305
    %v1343 = vunpack.c.l.b16 %v306
    %v1344 = vunpack.c.h.b16 %v306
    %v1345 = vunpack.c.l.b16 %v307
    %v1346 = vunpack.c.h.b16 %v307
    %v1347 = vunpack.c.l.b16 %v308
    %v1348 = vunpack.c.h.b16 %v308
    %v1349 = vunpack.c.l.b16 %v309
    %v1350 = vunpack.c.h.b16 %v309
    %v1351 = vunpack.c.l.b16 %v310
    %v1352 = vunpack.c.h.b16 %v310
    %v1353 = vunpack.c.l.b16 %v311
    %v1354 = vunpack.c.h.b16 %v311
    %v1355 = vunpack.c.l.b16 %v312
    %v1356 = vunpack.c.h.b16 %v312
    %v1357 = vunpack.c.l.b16 %v313
    %v1358 = vunpack.c.h.b16 %v313
    %v1359 = vunpack.c.l.b16 %v314
    %v1360 = vunpack.c.h.b16 %v314
    %v1361 = vunpack.c.l.b16 %v315
    %v1362 = vunpack.c.h.b16 %v315
    %v1363 = vunpack.c.l.b16 %v316
    %v1364 = vunpack.c.h.b16 %v316
    %v1365 = vunpack.c.l.b16 %v317
    %v1366 = vunpack.c.h.b16 %v317
    %v1367 = vunpack.c.l.b16 %v318
    %v1368 = vunpack.c.h.b16 %v318
    %v1369 = vunpack.c.l.b16 %v319
    %v1370 = vunpack.c.h.b16 %v319
    %v1371 = vunpack.c.l.b16 %v320
    %v1372 = vunpack.c.h.b16 %v320
    %v1373 = vunpack.c.l.b16 %v321
    %v1374 = vunpack.c.h.b16 %v321
    %v1375 = vunpack.c.l.b16 %v322
    %v1376 = vunpack.c.h.b16 %v322
    %v1377 = vunpack.c.l.b16 %v323
    %v1378 = vunpack.c.h.b16 %v323
    %v1379 = vunpack.c.l.b16 %v324
    %v1380 = vunpack.c.h.b16 %v324
    %v1381 = vunpack.c.l.b16 %v325
    %v1382 = vunpack.c.h.b16 %v325
    %v1383 = vunpack.c.l.b16 %v326
    %v1384 = vunpack.c.h.b16 %v326
    %v1385 = vunpack.c.l.b16 %v327
    %v1386 = vunpack.c.h.b16 %v327
    %v1387 = vunpack.c.l.b16 %v328
    %v1388 = vunpack.c.h.b16 %v328
    %v1389 = vunpack.c.l.b16 %v329
    %v1390 = vunpack.c.h.b16 %v329
    %v1391 = vunpack.c.l.b16 %v330
    %v1392 = vunpack.c.h.b16 %v330
    %v1393 = vunpack.c.l.b16 %v331
    %v1394 = vunpack.c.h.b16 %v331
    %v1395 = vunpack.c.l.b16 %v332
    %v1396 = vunpack.c.h.b16 %v332
    %v1397 = vunpack.c.l.b16 %v333
    %v1398 = vunpack.c.h.b16 %v333
    %v1399 = vunpack.c.l.b16 %v334
    %v1400 = vunpack.c.h.b16 %v334
    %v1401 = vunpack.c.l.b16 %v335
    %v1402 = vunpack.c.h.b16 %v335
    %v1403 = vunpack.c.l.b16 %v336
    %v1404 = vunpack.c.h.b16 %v336
    %v1405 = vunpack.c.l.b16 %v337
    %v1406 = vunpack.c.h.b16 %v337
    %v1407 = vunpack.c.l.b16 %v338
    %v1408 = vunpack.c.h.b16 %v338
    %v1409 = vunpack.c.l.b16 %v339
    %v1410 = vunpack.c.h.b16 %v339
    %v1411 = vunpack.c.l.b16 %v340
    %v1412 = vunpack.c.h.b16 %v340
    %v1413 = vunpack.c.l.b16 %v341
    %v1414 = vunpack.c.h.b16 %v341
    %v1415 = vunpack.c.l.b16 %v342
    %v1416 = vunpack.c.h.b16 %v342
    %v1417 = vunpack.c.l.b16 %v343
    %v1418 = vunpack.c.h.b16 %v343
    %v1419 = vunpack.c.l.b16 %v344
    %v1420 = vunpack.c.h.b16 %v344
    %v1421 = vunpack.c.l.b16 %v345
    %v1422 = vunpack.c.h.b16 %v345
    %v1423 = vunpack.c.l.b16 %v346
    %v1424 = vunpack.c.h.b16 %v346
    %v1425 = vunpack.c.l.b16 %v347
    %v1426 = vunpack.c.h.b16 %v347
    %v1427 = vunpack.c.l.b16 %v348
    %v1428 = vunpack.c.h.b16 %v348
    %v1429 = vunpack.c.l.b16 %v349
    %v1430 = vunpack.c.h.b16 %v349
    %v1431 = vunpack.c.l.b16 %v350
    %v1432 = vunpack.c.h.b16 %v350
    %v1433 = vunpack.c.l.b16 %v351
    %v1434 = vunpack.c.h.b16 %v351
    %v1435 = vunpack.c.l.b16 %v352
    %v1436 = vunpack.c.h.b16 %v352
    %v1437 = vunpack.c.l.b16 %v353
    %v1438 = vunpack.c.h.b16 %v353
    %v1439 = vunpack.c.l.b16 %v354
    %v1440 = vunpack.c.h.b16 %v354
    %v1441 = vunpack.c.l.b16 %v355
    %v1442 = vunpack.c.h.b16 %v355
    %v1443 = vunpack.c.l.b16 %v356
    %v1444 = vunpack.c.h.b16 %v356
    %v1445 = vunpack.c.l.b16 %v357
    %v1446 = vunpack.c.h.b16 %v357
    %v1447 = vunpack.c.l.b16 %v358
    %v1448 = vunpack.c.h.b16 %v358
    %v1449 = vunpack.c.l.b16 %v359
    %v1450 = vunpack.c.h.b16 %v359
    %v1451 = vunpack.c.l.b16 %v360
    %v1452 = vunpack.c.h.b16 %v360
    %v1453 = vunpack.c.l.b16 %v361
    %v1454 = vunpack.c.h.b16 %v361
    %v1455 = vunpack.c.l.b16 %v362
    %v1456 = vunpack.c.h.b16 %v362
    %v1457 = vunpack.c.l.b16 %v363
    %v1458 = vunpack.c.h.b16 %v363
    %v1459 = vunpack.c.l.b16 %v364
    %v1460 = vunpack.c.h.b16 %v364
    %v1461 = vunpack.c.l.b16 %v365
    %v1462 = vunpack.c.h.b16 %v365
    %v1463 = vunpack.c.l.b16 %v366
    %v1464 = vunpack.c.h.b16 %v366
    %v1465 = vunpack.c.l.b16 %v367
    %v1466 = vunpack.c.h.b16 %v367
    %v1467 = vunpack.c.l.b16 %v368
    %v1468 = vunpack.c.h.b16 %v368
    %v1469 = vunpack.c.l.b16 %v369
    %v1470 = vunpack.c.h.b16 %v369
    %v1471 = vunpack.c.l.b16 %v370
    %v1472 = vunpack.c.h.b16 %v370
    %v1473 = vunpack.c.l.b16 %v371
    %v1474 = vunpack.c.h.b16 %v371
    %v1475 = vunpack.c.l.b16 %v372
    %v1476 = vunpack.c.h.b16 %v372
    %v1477 = vunpack.c.l.b16 %v373
    %v1478 = vunpack.c.h.b16 %v373
    %v1479 = vunpack.c.l.b16 %v374
    %v1480 = vunpack.c.h.b16 %v374
    %v1481 = vunpack.c.l.b16 %v375
    %v1482 = vunpack.c.h.b16 %v375
    %v1483 = vunpack.c.l.b16 %v376
    %v1484 = vunpack.c.h.b16 %v376
    %v1485 = vunpack.c.l.b16 %v377
    %v1486 = vunpack.c.h.b16 %v377
    %v1487 = vunpack.c.l.b16 %v378
    %v1488 = vunpack.c.h.b16 %v378
    %v1489 = vunpack.c.l.b16 %v379
    %v1490 = vunpack.c.h.b16 %v379
    %v1491 = vunpack.c.l.b16 %v380
    %v1492 = vunpack.c.h.b16 %v380
    %v1493 = vunpack.c.l.b16 %v381
    %v1494 = vunpack.c.h.b16 %v381
    %v1495 = vunpack.c.l.b16 %v382
    %v1496 = vunpack.c.h.b16 %v382
    %v1497 = vunpack.c.l.b16 %v383
    %v1498 = vunpack.c.h.b16 %v383
    %v1499 = vunpack.c.l.b16 %v384
    %v1500 = vunpack.c.h.b16 %v384
    %v1501 = vunpack.c.l.b16 %v385
    %v1502 = vunpack.c.h.b16 %v385
    %v1503 = vunpack.c.l.b16 %v386
    %v1504 = vunpack.c.h.b16 %v386
    %v1505 = vunpack.c.l.b16 %v387
    %v1506 = vunpack.c.h.b16 %v387
    %v1507 = vunpack.c.l.b16 %v388
    %v1508 = vunpack.c.h.b16 %v388
    %v1509 = vunpack.c.l.b16 %v389
    %v1510 = vunpack.c.h.b16 %v389
    %v1511 = vunpack.c.l.b16 %v390
    %v1512 = vunpack.c.h.b16 %v390
    %v1513 = vunpack.c.l.b16 %v391
    %v1514 = vunpack.c.h.b16 %v391
    %v1515 = vunpack.c.l.b16 %v392
    %v1516 = vunpack.c.h.b16 %v392
    %v1517 = vunpack.c.l.b16 %v393
    %v1518 = vunpack.c.h.b16 %v393
    %v1519 = vunpack.c.l.b16 %v394
    %v1520 = vunpack.c.h.b16 %v394
    %v1521 = vunpack.c.l.b16 %v395
    %v1522 = vunpack.c.h.b16 %v395
    %v1523 = vunpack.c.l.b16 %v396
    %v1524 = vunpack.c.h.b16 %v396
    %v1525 = vunpack.c.l.b16 %v397
    %v1526 = vunpack.c.h.b16 %v397
    %v1527 = vunpack.c.l.b16 %v398
    %v1528 = vunpack.c.h.b16 %v398
    %v1529 = vunpack.c.l.b16 %v399
    %v1530 = vunpack.c.h.b16 %v399
    %v1531 = vunpack.c.l.b16 %v400
    %v1532 = vunpack.c.h.b16 %v400
    %v1533 = vunpack.c.l.b16 %v401
    %v1534 = vunpack.c.h.b16 %v401
    %v1535 = vunpack.c.l.b16 %v402
    %v1536 = vunpack.c.h.b16 %v402
    %v1537 = vunpack.c.l.b16 %v403
    %v1538 = vunpack.c.h.b16 %v403
    %v1539 = vunpack.c.l.b16 %v404
    %v1540 = vunpack.c.h.b16 %v404
    %v1541 = vunpack.c.l.b16 %v405
    %v1542 = vunpack.c.h.b16 %v405
    %v1543 = vunpack.c.l.b16 %v406
    %v1544 = vunpack.c.h.b16 %v406
    %v1545 = vunpack.c.l.b16 %v407
    %v1546 = vunpack.c.h.b16 %v407
    %v1547 = vunpack.c.l.b16 %v408
    %v1548 = vunpack.c.h.b16 %v408
    %v1549 = vunpack.c.l.b16 %v409
    %v1550 = vunpack.c.h.b16 %v409
    %v1551 = vunpack.c.l.b16 %v410
    %v1552 = vunpack.c.h.b16 %v410
    %v1553 = vunpack.c.l.b16 %v411
    %v1554 = vunpack.c.h.b16 %v411
    %v1555 = vunpack.c.l.b16 %v412
    %v1556 = vunpack.c.h.b16 %v412
    %v1557 = vunpack.c.l.b16 %v413
    %v1558 = vunpack.c.h.b16 %v413
    %v1559 = vunpack.c.l.b16 %v414
    %v1560 = vunpack.c.h.b16 %v414
    %v1561 = vunpack.c.l.b16 %v415
    %v1562 = vunpack.c.h.b16 %v415
    %v1563 = vunpack.c.l.b16 %v416
    %v1564 = vunpack.c.h.b16 %v416
    %v1565 = vunpack.c.l.b16 %v417
    %v1566 = vunpack.c.h.b16 %v417
    %v1567 = vunpack.c.l.b16 %v418
    %v1568 = vunpack.c.h.b16 %v418
    %v1569 = vunpack.c.l.b16 %v419
    %v1570 = vunpack.c.h.b16 %v419
    %v1571 = vunpack.c.l.b16 %v420
    %v1572 = vunpack.c.h.b16 %v420
    %v1573 = vunpack.c.l.b16 %v421
    %v1574 = vunpack.c.h.b16 %v421
    %v1575 = vunpack.c.l.b16 %v422
    %v1576 = vunpack.c.h.b16 %v422
    %v1577 = vunpack.c.l.b16 %v423
    %v1578 = vunpack.c.h.b16 %v423
    %v1579 = vunpack.c.l.b16 %v424
    %v1580 = vunpack.c.h.b16 %v424
    %v1581 = vunpack.c.l.b16 %v425
    %v1582 = vunpack.c.h.b16 %v425
    %v1583 = vunpack.c.l.b16 %v426
    %v1584 = vunpack.c.h.b16 %v426
    %v1585 = vunpack.c.l.b16 %v427
    %v1586 = vunpack.c.h.b16 %v427
    %v1587 = vunpack.c.l.b16 %v428
    %v1588 = vunpack.c.h.b16 %v428
    %v1589 = vunpack.c.l.b16 %v429
    %v1590 = vunpack.c.h.b16 %v429
    %v1591 = vunpack.c.l.b16 %v430
    %v1592 = vunpack.c.h.b16 %v430
    %v1593 = vunpack.c.l.b16 %v431
    %v1594 = vunpack.c.h.b16 %v431
    %v1595 = vunpack.c.l.b16 %v432
    %v1596 = vunpack.c.h.b16 %v432
    %v1597 = vunpack.c.l.b16 %v433
    %v1598 = vunpack.c.h.b16 %v433
    %v1599 = vunpack.c.l.b16 %v434
    %v1600 = vunpack.c.h.b16 %v434
    %v1601 = vunpack.c.l.b16 %v435
    %v1602 = vunpack.c.h.b16 %v435
    %v1603 = vunpack.c.l.b16 %v436
    %v1604 = vunpack.c.h.b16 %v436
    %v1605 = vunpack.c.l.b16 %v437
    %v1606 = vunpack.c.h.b16 %v437
    %v1607 = vunpack.c.l.b16 %v438
    %v1608 = vunpack.c.h.b16 %v438
    %v1609 = vunpack.c.l.b16 %v439
    %v1610 = vunpack.c.h.b16 %v439
    %v1611 = vunpack.c.l.b16 %v440
    %v1612 = vunpack.c.h.b16 %v440
    %v1613 = vunpack.c.l.b16 %v441
    %v1614 = vunpack.c.h.b16 %v441
    %v1615 = vunpack.c.l.b16 %v442
    %v1616 = vunpack.c.h.b16 %v442
    %v1617 = vunpack.c.l.b16 %v443
    %v1618 = vunpack.c.h.b16 %v443
    %v1619 = vunpack.c.l.b16 %v444
    %v1620 = vunpack.c.h.b16 %v444
    %v1621 = vunpack.c.l.b16 %v445
    %v1622 = vunpack.c.h.b16 %v445
    %v1623 = vunpack.c.l.b16 %v446
    %v1624 = vunpack.c.h.b16 %v446
    %v1625 = vunpack.c.l.b16 %v447
    %v1626 = vunpack.c.h.b16 %v447
    %v1627 = vunpack.c.l.b16 %v448
    %v1628 = vunpack.c.h.b16 %v448
    %v1629 = vunpack.c.l.b16 %v449
    %v1630 = vunpack.c.h.b16 %v449
    %v1631 = vunpack.c.l.b16 %v450
    %v1632 = vunpack.c.h.b16 %v450
    %v1633 = vunpack.c.l.b16 %v451
    %v1634 = vunpack.c.h.b16 %v451
    %v1635 = vunpack.c.l.b16 %v452
    %v1636 = vunpack.c.h.b16 %v452
    %v1637 = vunpack.c.l.b16 %v453
    %v1638 = vunpack.c.h.b16 %v453
    %v1639 = vunpack.c.l.b16 %v454
    %v1640 = vunpack.c.h.b16 %v454
    %v1641 = vunpack.c.l.b16 %v455
    %v1642 = vunpack.c.h.b16 %v455
    %v1643 = vunpack.c.l.b16 %v456
    %v1644 = vunpack.c.h.b16 %v456
    %v1645 = vunpack.c.l.b16 %v457
    %v1646 = vunpack.c.h.b16 %v457
    %v1647 = vunpack.c.l.b16 %v458
    %v1648 = vunpack.c.h.b16 %v458
    %v1649 = vunpack.c.l.b16 %v459
    %v1650 = vunpack.c.h.b16 %v459
    %v1651 = vunpack.c.l.b16 %v460
    %v1652 = vunpack.c.h.b16 %v460
    %v1653 = vunpack.c.l.b16 %v461
    %v1654 = vunpack.c.h.b16 %v461
    %v1655 = vunpack.c.l.b16 %v462
    %v1656 = vunpack.c.h.b16 %v462
    %v1657 = vunpack.c.l.b16 %v463
    %v1658 = vunpack.c.h.b16 %v463
    %v1659 = vunpack.c.l.b16 %v464
    %v1660 = vunpack.c.h.b16 %v464
    %v1661 = vunpack.c.l.b16 %v465
    %v1662 = vunpack.c.h.b16 %v465
    %v1663 = vunpack.c.l.b16 %v466
    %v1664 = vunpack.c.h.b16 %v466
    %v1665 = vunpack.c.l.b16 %v467
    %v1666 = vunpack.c.h.b16 %v467
    %v1667 = vunpack.c.l.b16 %v468
    %v1668 = vunpack.c.h.b16 %v468
    %v1669 = vunpack.c.l.b16 %v469
    %v1670 = vunpack.c.h.b16 %v469
    %v1671 = vunpack.c.l.b16 %v470
    %v1672 = vunpack.c.h.b16 %v470
    %v1673 = vunpack.c.l.b16 %v471
    %v1674 = vunpack.c.h.b16 %v471
    %v1675 = vunpack.c.l.b16 %v472
    %v1676 = vunpack.c.h.b16 %v472
    %v1677 = vunpack.c.l.b16 %v473
    %v1678 = vunpack.c.h.b16 %v473
    %v1679 = vunpack.c.l.b16 %v474
    %v1680 = vunpack.c.h.b16 %v474
    %v1681 = vunpack.c.l.b16 %v475
    %v1682 = vunpack.c.h.b16 %v475
    %v1683 = vunpack.c.l.b16 %v476
    %v1684 = vunpack.c.h.b16 %v476
    %v1685 = vunpack.c.l.b16 %v477
    %v1686 = vunpack.c.h.b16 %v477
    %v1687 = vunpack.c.l.b16 %v478
    %v1688 = vunpack.c.h.b16 %v478
    %v1689 = vunpack.c.l.b16 %v479
    %v1690 = vunpack.c.h.b16 %v479
    %v1691 = vunpack.c.l.b16 %v480
    %v1692 = vunpack.c.h.b16 %v480
    %v1693 = vunpack.c.l.b16 %v481
    %v1694 = vunpack.c.h.b16 %v481
    %v1695 = vunpack.c.l.b16 %v482
    %v1696 = vunpack.c.h.b16 %v482
    %v1697 = vunpack.c.l.b16 %v483
    %v1698 = vunpack.c.h.b16 %v483
    %v1699 = vunpack.c.l.b16 %v484
    %v1700 = vunpack.c.h.b16 %v484
    %v1701 = vunpack.c.l.b16 %v485
    %v1702 = vunpack.c.h.b16 %v485
    %v1703 = vunpack.c.l.b16 %v486
    %v1704 = vunpack.c.h.b16 %v486
    %v1705 = vunpack.c.l.b16 %v487
    %v1706 = vunpack.c.h.b16 %v487
    %v1707 = vunpack.c.l.b16 %v488
    %v1708 = vunpack.c.h.b16 %v488
    %v1709 = vunpack.c.l.b16 %v489
    %v1710 = vunpack.c.h.b16 %v489
    %v1711 = vunpack.c.l.b16 %v490
    %v1712 = vunpack.c.h.b16 %v490
    %v1713 = vpack.c.b16 %v949, %v945
    %v1714 = vpack.c.b16 %v950, %v946
    %v1715 = vpack.c.b16 %v951, %v947
    %v1716 = vpack.c.b16 %v952, %v948
    %v1717 = vpack.c.b16 %v957, %v953
    %v1718 = vpack.c.b16 %v958, %v954
    %v1719 = vpack.c.b16 %v959, %v955
    %v1720 = vpack.c.b16 %v960, %v956
    %v1721 = vpack.c.b16 %v965, %v961
    %v1722 = vpack.c.b16 %v966, %v962
    %v1723 = vpack.c.b16 %v967, %v963
    %v1724 = vpack.c.b16 %v968, %v964
    %v1725 = vpack.c.b16 %v973, %v969
    %v1726 = vpack.c.b16 %v974, %v970
    %v1727 = vpack.c.b16 %v975, %v971
    %v1728 = vpack.c.b16 %v976, %v972
    %v1729 = vpack.c.b16 %v981, %v977
    %v1730 = vpack.c.b16 %v982, %v978
    %v1731 = vpack.c.b16 %v983, %v979
    %v1732 = vpack.c.b16 %v984, %v980
    %v1733 = vpack.c.b16 %v989, %v985
    %v1734 = vpack.c.b16 %v990, %v986
    %v1735 = vpack.c.b16 %v991, %v987
    %v1736 = vpack.c.b16 %v992, %v988
    %v1737 = vpack.c.b16 %v997, %v993
    %v1738 = vpack.c.b16 %v998, %v994
    %v1739 = vpack.c.b16 %v999, %v995
    %v1740 = vpack.c.b16 %v1000, %v996
    %v1741 = vpack.c.b16 %v1005, %v1001
    %v1742 = vpack.c.b16 %v1006, %v1002
    %v1743 = vpack.c.b16 %v1007, %v1003
    %v1744 = vpack.c.b16 %v1008, %v1004
    %v1745 = vpack.c.b16 %v1013, %v1009
    %v1746 = vpack.c.b16 %v1014, %v1010
    %v1747 = vpack.c.b16 %v1015, %v1011
    %v1748 = vpack.c.b16 %v1016, %v1012
    %v1749 = vpack.c.b16 %v1021, %v1017
    %v1750 = vpack.c.b16 %v1022, %v1018
    %v1751 = vpack.c.b16 %v1023, %v1019
    %v1752 = vpack.c.b16 %v1024, %v1020
    %v1753 = vpack.c.b16 %v1029, %v1025
    %v1754 = vpack.c.b16 %v1030, %v1026
    %v1755 = vpack.c.b16 %v1031, %v1027
    %v1756 = vpack.c.b16 %v1032, %v1028
    %v1757 = vpack.c.b16 %v1037, %v1033
    %v1758 = vpack.c.b16 %v1038, %v1034
    %v1759 = vpack.c.b16 %v1039, %v1035
    %v1760 = vpack.c.b16 %v1040, %v1036
    %v1761 = vpack.c.b16 %v1045, %v1041
    %v1762 = vpack.c.b16 %v1046, %v1042
    %v1763 = vpack.c.b16 %v1047, %v1043
    %v1764 = vpack.c.b16 %v1048, %v1044
    %v1765 = vpack.c.b16 %v1053, %v1049
    %v1766 = vpack.c.b16 %v1054, %v1050
    %v1767 = vpack.c.b16 %v1055, %v1051
    %v1768 = vpack.c.b16 %v1056, %v1052
    %v1769 = vpack.c.b16 %v1061, %v1057
    %v1770 = vpack.c.b16 %v1062, %v1058
    %v1771 = vpack.c.b16 %v1063, %v1059
    %v1772 = vpack.c.b16 %v1064, %v1060
    %v1773 = vpack.c.b16 %v1069, %v1065
    %v1774 = vpack.c.b16 %v1070, %v1066
    %v1775 = vpack.c.b16 %v1071, %v1067
    %v1776 = vpack.c.b16 %v1072, %v1068
    %v1777 = vpack.c.b16 %v1077, %v1073
    %v1778 = vpack.c.b16 %v1078, %v1074
    %v1779 = vpack.c.b16 %v1079, %v1075
    %v1780 = vpack.c.b16 %v1080, %v1076
    %v1781 = vpack.c.b16 %v1085, %v1081
    %v1782 = vpack.c.b16 %v1086, %v1082
    %v1783 = vpack.c.b16 %v1087, %v1083
    %v1784 = vpack.c.b16 %v1088, %v1084
    %v1785 = vpack.c.b16 %v1093, %v1089
    %v1786 = vpack.c.b16 %v1094, %v1090
    %v1787 = vpack.c.b16 %v1095, %v1091
    %v1788 = vpack.c.b16 %v1096, %v1092
    %v1789 = vpack.c.b16 %v1101, %v1097
    %v1790 = vpack.c.b16 %v1102, %v1098
    %v1791 = vpack.c.b16 %v1103, %v1099
    %v1792 = vpack.c.b16 %v1104, %v1100
    %v1793 = vpack.c.b16 %v1109, %v1105
    %v1794 = vpack.c.b16 %v1110, %v1106
    %v1795 = vpack.c.b16 %v1111, %v1107
    %v1796 = vpack.c.b16 %v1112, %v1108
    %v1797 = vpack.c.b16 %v1117, %v1113
    %v1798 = vpack.c.b16 %v1118, %v1114
    %v1799 = vpack.c.b16 %v1119, %v1115
    %v1800 = vpack.c.b16 %v1120, %v1116
    %v1801 = vpack.c.b16 %v1125, %v1121
    %v1802 = vpack.c.b16 %v1126, %v1122
    %v1803 = vpack.c.b16 %v1127, %v1123
    %v1804 = vpack.c.b16 %v1128, %v1124
    %v1805 = vpack.c.b16 %v1133, %v1129
    %v1806 = vpack.c.b16 %v1134, %v1130
    %v1807 = vpack.c.b16 %v1135, %v1131
    %v1808 = vpack.c.b16 %v1136, %v1132
    %v1809 = vpack.c.b16 %v1141, %v1137
    %v1810 = vpack.c.b16 %v1142, %v1138
    %v1811 = vpack.c.b16 %v1143, %v1139
    %v1812 = vpack.c.b16 %v1144, %v1140
    %v1813 = vpack.c.b16 %v1149, %v1145
    %v1814 = vpack.c.b16 %v1150, %v1146
    %v1815 = vpack.c.b16 %v1151, %v1147
    %v1816 = vpack.c.b16 %v1152, %v1148
    %v1817 = vpack.c.b16 %v1157, %v1153
    %v1818 = vpack.c.b16 %v1158, %v1154
    %v1819 = vpack.c.b16 %v1159, %v1155
    %v1820 = vpack.c.b16 %v1160, %v1156
    %v1821 = vpack.c.b16 %v1165, %v1161
    %v1822 = vpack.c.b16 %v1166, %v1162
    %v1823 = vpack.c.b16 %v1167, %v1163
    %v1824 = vpack.c.b16 %v1168, %v1164
    %v1825 = vpack.c.b16 %v1173, %v1169
    %v1826 = vpack.c.b16 %v1174, %v1170
    %v1827 = vpack.c.b16 %v1175, %v1171
    %v1828 = vpack.c.b16 %v1176, %v1172
    %v1829 = vpack.c.b16 %v1181, %v1177
    %v1830 = vpack.c.b16 %v1182, %v1178
    %v1831 = vpack.c.b16 %v1183, %v1179
    %v1832 = vpack.c.b16 %v1184, %v1180
    %v1833 = vpack.c.b16 %v1189, %v1185
    %v1834 = vpack.c.b16 %v1190, %v1186
    %v1835 = vpack.c.b16 %v1191, %v1187
    %v1836 = vpack.c.b16 %v1192, %v1188
    %v1837 = vpack.c.b16 %v1197, %v1193
    %v1838 = vpack.c.b16 %v1198, %v1194
    %v1839 = vpack.c.b16 %v1199, %v1195
    %v1840 = vpack.c.b16 %v1200, %v1196
    %v1841 = vpack.c.b16 %v1205, %v1201
    %v1842 = vpack.c.b16 %v1206, %v1202
    %v1843 = vpack.c.b16 %v1207, %v1203
    %v1844 = vpack.c.b16 %v1208, %v1204
    %v1845 = vpack.c.b16 %v1213, %v1209
    %v1846 = vpack.c.b16 %v1214, %v1210
    %v1847 = vpack.c.b16 %v1215, %v1211
    %v1848 = vpack.c.b16 %v1216, %v1212
    %v1849 = vpack.c.b16 %v1221, %v1217
    %v1850 = vpack.c.b16 %v1222, %v1218
    %v1851 = vpack.c.b16 %v1223, %v1219
    %v1852 = vpack.c.b16 %v1224, %v1220
    %v1853 = vpack.c.b16 %v1229, %v1225
    %v1854 = vpack.c.b16 %v1230, %v1226
    %v1855 = vpack.c.b16 %v1231, %v1227
    %v1856 = vpack.c.b16 %v1232, %v1228
    %v1857 = vpack.c.b16 %v1237, %v1233
    %v1858 = vpack.c.b16 %v1238, %v1234
    %v1859 = vpack.c.b16 %v1239, %v1235
    %v1860 = vpack.c.b16 %v1240, %v1236
    %v1861 = vpack.c.b16 %v1245, %v1241
    %v1862 = vpack.c.b16 %v1246, %v1242
    %v1863 = vpack.c.b16 %v1247, %v1243
    %v1864 = vpack.c.b16 %v1248, %v1244
    %v1865 = vpack.c.b16 %v1253, %v1249
    %v1866 = vpack.c.b16 %v1254, %v1250
    %v1867 = vpack.c.b16 %v1255, %v1251
    %v1868 = vpack.c.b16 %v1256, %v1252
    %v1869 = vpack.c.b16 %v1261, %v1257
    %v1870 = vpack.c.b16 %v1262, %v1258
    %v1871 = vpack.c.b16 %v1263, %v1259
    %v1872 = vpack.c.b16 %v1264, %v1260
    %v1873 = vpack.c.b16 %v1269, %v1265
    %v1874 = vpack.c.b16 %v1270, %v1266
    %v1875 = vpack.c.b16 %v1271, %v1267
    %v1876 = vpack.c.b16 %v1272, %v1268
    %v1877 = vpack.c.b16 %v1277, %v1273
    %v1878 = vpack.c.b16 %v1278, %v1274
    %v1879 = vpack.c.b16 %v1279, %v1275
    %v1880 = vpack.c.b16 %v1280, %v1276
    %v1881 = vpack.c.b16 %v1285, %v1281
    %v1882 = vpack.c.b16 %v1286, %v1282
    %v1883 = vpack.c.b16 %v1287, %v1283
    %v1884 = vpack.c.b16 %v1288, %v1284
    %v1885 = vpack.c.b16 %v1293, %v1289
    %v1886 = vpack.c.b16 %v1294, %v1290
    %v1887 = vpack.c.b16 %v1295, %v1291
    %v1888 = vpack.c.b16 %v1296, %v1292
    %v1889 = vpack.c.b16 %v1301, %v1297
    %v1890 = vpack.c.b16 %v1302, %v1298
    %v1891 = vpack.c.b16 %v1303, %v1299
    %v1892 = vpack.c.b16 %v1304, %v1300
    %v1893 = vpack.c.b16 %v1309, %v1305
    %v1894 = vpack.c.b16 %v1310, %v1306
    %v1895 = vpack.c.b16 %v1311, %v1307
    %v1896 = vpack.c.b16 %v1312, %v1308
    %v1897 = vpack.c.b16 %v1317, %v1313
    %v1898 = vpack.c.b16 %v1318, %v1314
    %v1899 = vpack.c.b16 %v1319, %v1315
    %v1900 = vpack.c.b16 %v1320, %v1316
    %v1901 = vpack.c.b16 %v1325, %v1321
    %v1902 = vpack.c.b16 %v1326, %v1322
    %v1903 = vpack.c.b16 %v1327, %v1323
    %v1904 = vpack.c.b16 %v1328, %v1324
    %v1905 = vpack.c.b16 %v1333, %v1329
    %v1906 = vpack.c.b16 %v1334, %v1330
    %v1907 = vpack.c.b16 %v1335, %v1331
    %v1908 = vpack.c.b16 %v1336, %v1332
    %v1909 = vpack.c.b16 %v1341, %v1337
    %v1910 = vpack.c.b16 %v1342, %v1338
    %v1911 = vpack.c.b16 %v1343, %v1339
    %v1912 = vpack.c.b16 %v1344, %v1340
    %v1913 = vpack.c.b16 %v1349, %v1345
    %v1914 = vpack.c.b16 %v1350, %v1346
    %v1915 = vpack.c.b16 %v1351, %v1347
    %v1916 = vpack.c.b16 %v1352, %v1348
    %v1917 = vpack.c.b16 %v1357, %v1353
    %v1918 = vpack.c.b16 %v1358, %v1354
    %v1919 = vpack.c.b16 %v1359, %v1355
    %v1920 = vpack.c.b16 %v1360, %v1356
    %v1921 = vpack.c.b16 %v1365, %v1361
    %v1922 = vpack.c.b16 %v1366, %v1362
    %v1923 = vpack.c.b16 %v1367, %v1363
    %v1924 = vpack.c.b16 %v1368, %v1364
    %v1925 = vpack.c.b16 %v1373, %v1369
    %v1926 = vpack.c.b16 %v1374, %v1370
    %v1927 = vpack.c.b16 %v1375, %v1371
    %v1928 = vpack.c.b16 %v1376, %v1372
    %v1929 = vpack.c.b16 %v1381, %v1377
    %v1930 = vpack.c.b16 %v1382, %v1378
    %v1931 = vpack.c.b16 %v1383, %v1379
    %v1932 = vpack.c.b16 %v1384, %v1380
    %v1933 = vpack.c.b16 %v1389, %v1385
    %v1934 = vpack.c.b16 %v1390, %v1386
    %v1935 = vpack.c.b16 %v1391, %v1387
    %v1936 = vpack.c.b16 %v1392, %v1388
    %v1937 = vpack.c.b16 %v1397, %v1393
    %v1938 = vpack.c.b16 %v1398, %v1394
    %v1939 = vpack.c.b16 %v1399, %v1395
    %v1940 = vpack.c.b16 %v1400, %v1396
    %v1941 = vpack.c.b16 %v1405, %v1401
    %v1942 = vpack.c.b16 %v1406, %v1402
    %v1943 = vpack.c.b16 %v1407, %v1403
    %v1944 = vpack.c.b16 %v1408, %v1404
    %v1945 = vpack.c.b16 %v1413, %v1409
    %v1946 = vpack.c.b16 %v1414, %v1410
    %v1947 = vpack.c.b16 %v1415, %v1411
    %v1948 = vpack.c.b16 %v1416, %v1412
    %v1949 = vpack.c.b16 %v1421, %v1417
    %v1950 = vpack.c.b16 %v1422, %v1418
    %v1951 = vpack.c.b16 %v1423, %v1419
    %v1952 = vpack.c.b16 %v1424, %v1420
    %v1953 = vpack.c.b16 %v1429, %v1425
    %v1954 = vpack.c.b16 %v1430, %v1426
    %v1955 = vpack.c.b16 %v1431, %v1427
    %v1956 = vpack.c.b16 %v1432, %v1428
    %v1957 = vpack.c.b16 %v1437, %v1433
    %v1958 = vpack.c.b16 %v1438, %v1434
    %v1959 = vpack.c.b16 %v1439, %v1435
    %v1960 = vpack.c.b16 %v1440, %v1436
    %v1961 = vpack.c.b16 %v1445, %v1441
    %v1962 = vpack.c.b16 %v1446, %v1442
    %v1963 = vpack.c.b16 %v1447, %v1443
    %v1964 = vpack.c.b16 %v1448, %v1444
    %v1965 = vpack.c.b16 %v1453, %v1449
    %v1966 = vpack.c.b16 %v1454, %v1450
    %v1967 = vpack.c.b16 %v1455, %v1451
    %v1968 = vpack.c.b16 %v1456, %v1452
    %v1969 = vpack.c.b16 %v1461, %v1457
    %v1970 = vpack.c.b16 %v1462, %v1458
    %v1971 = vpack.c.b16 %v1463, %v1459
    %v1972 = vpack.c.b16 %v1464, %v1460
    %v1973 = vpack.c.b16 %v1469, %v1465
    %v1974 = vpack.c.b16 %v1470, %v1466
    %v1975 = vpack.c.b16 %v1471, %v1467
    %v1976 = vpack.c.b16 %v1472, %v1468
    %v1977 = vpack.c.b16 %v1477, %v1473
    %v1978 = vpack.c.b16 %v1478, %v1474
    %v1979 = vpack.c.b16 %v1479, %v1475
    %v1980 = vpack.c.b16 %v1480, %v1476
    %v1981 = vpack.c.b16 %v1485, %v1481
    %v1982 = vpack.c.b16 %v1486, %v1482
    %v1983 = vpack.c.b16 %v1487, %v1483
    %v1984 = vpack.c.b16 %v1488, %v1484
    %v1985 = vpack.c.b16 %v1493, %v1489
    %v1986 = vpack.c.b16 %v1494, %v1490
    %v1987 = vpack.c.b16 %v1495, %v1491
    %v1988 = vpack.c.b16 %v1496, %v1492
    %v1989 = vpack.c.b16 %v1501, %v1497
    %v1990 = vpack.c.b16 %v1502, %v1498
    %v1991 = vpack.c.b16 %v1503, %v1499
    %v1992 = vpack.c.b16 %v1504, %v1500
    %v1993 = vpack.c.b16 %v1509, %v1505
    %v1994 = vpack.c.b16 %v1510, %v1506
    %v1995 = vpack.c.b16 %v1511, %v1507
    %v1996 = vpack.c.b16 %v1512, %v1508
    %v1997 = vpack.c.b16 %v1517, %v1513
    %v1998 = vpack.c.b16 %v1518, %v1514
    %v1999 = vpack.c.b16 %v1519, %v1515
    %v2000 = vpack.c.b16 %v1520, %v1516
    %v2001 = vpack.c.b16 %v1525, %v1521
    %v2002 = vpack.c.b16 %v1526, %v1522
    %v2003 = vpack.c.b16 %v1527, %v1523
    %v2004 = vpack.c.b16 %v1528, %v1524
    %v2005 = vpack.c.b16 %v1533, %v1529
    %v2006 = vpack.c.b16 %v1534, %v1530
    %v2007 = vpack.c.b16 %v1535, %v1531
    %v2008 = vpack.c.b16 %v1536, %v1532
    %v2009 = vpack.c.b16 %v1541, %v1537
    %v2010 = vpack.c.b16 %v1542, %v1538
    %v2011 = vpack.c.b16 %v1543, %v1539
    %v2012 = vpack.c.b16 %v1544, %v1540
    %v2013 = vpack.c.b16 %v1549, %v1545
    %v2014 = vpack.c.b16 %v1550, %v1546
    %v2015 = vpack.c.b16 %v1551, %v1547
    %v2016 = vpack.c.b16 %v1552, %v1548
    %v2017 = vpack.c.b16 %v1557, %v1553
    %v2018 = vpack.c.b16 %v1558, %v1554
    %v2019 = vpack.c.b16 %v1559, %v1555
    %v2020 = vpack.c.b16 %v1560, %v1556
    %v2021 = vpack.c.b16 %v1565, %v1561
    %v2022 = vpack.c.b16 %v1566, %v1562
    %v2023 = vpack.c.b16 %v1567, %v1563
    %v2024 = vpack.c.b16 %v1568, %v1564
    %v2025 = vpack.c.b16 %v1573, %v1569
    %v2026 = vpack.c.b16 %v1574, %v1570
    %v2027 = vpack.c.b16 %v1575, %v1571
    %v2028 = vpack.c.b16 %v1576, %v1572
    %v2029 = vpack.c.b16 %v1581, %v1577
    %v2030 = vpack.c.b16 %v1582, %v1578
    %v2031 = vpack.c.b16 %v1583, %v1579
    %v2032 = vpack.c.b16 %v1584, %v1580
    %v2033 = vpack.c.b16 %v1589, %v1585
    %v2034 = vpack.c.b16 %v1590, %v1586
    %v2035 = vpack.c.b16 %v1591, %v1587
    %v2036 = vpack.c.b16 %v1592, %v1588
    %v2037 = vpack.c.b16 %v1597, %v1593
    %v2038 = vpack.c.b16 %v1598, %v1594
    %v2039 = vpack.c.b16 %v1599, %v1595
    %v2040 = vpack.c.b16 %v1600, %v1596
    %v2041 = vpack.c.b16 %v1605, %v1601
    %v2042 = vpack.c.b16 %v1606, %v1602
    %v2043 = vpack.c.b16 %v1607, %v1603
    %v2044 = vpack.c.b16 %v1608, %v1604
    %v2045 = vpack.c.b16 %v1613, %v1609
    %v2046 = vpack.c.b16 %v1614, %v1610
    %v2047 = vpack.c.b16 %v1615, %v1611
    %v2048 = vpack.c.b16 %v1616, %v1612
    %v2049 = vpack.c.b16 %v1621, %v1617
    %v2050 = vpack.c.b16 %v1622, %v1618
    %v2051 = vpack.c.b16 %v1623, %v1619
    %v2052 = vpack.c.b16 %v1624, %v1620
    %v2053 = vpack.c.b16 %v1629, %v1625
    %v2054 = vpack.c.b16 %v1630, %v1626
    %v2055 = vpack.c.b16 %v1631, %v1627
    %v2056 = vpack.c.b16 %v1632, %v1628
    %v2057 = vpack.c.b16 %v1637, %v1633
    %v2058 = vpack.c.b16 %v1638, %v1634
    %v2059 = vpack.c.b16 %v1639, %v1635
    %v2060 = vpack.c.b16 %v1640, %v1636
    %v2061 = vpack.c.b16 %v1645, %v1641
    %v2062 = vpack.c.b16 %v1646, %v1642
    %v2063 = vpack.c.b16 %v1647, %v1643
    %v2064 = vpack.c.b16 %v1648, %v1644
    %v2065 = vpack.c.b16 %v1653, %v1649
    %v2066 = vpack.c.b16 %v1654, %v1650
    %v2067 = vpack.c.b16 %v1655, %v1651
    %v2068 = vpack.c.b16 %v1656, %v1652
    %v2069 = vpack.c.b16 %v1661, %v1657
    %v2070 = vpack.c.b16 %v1662, %v1658
    %v2071 = vpack.c.b16 %v1663, %v1659
    %v2072 = vpack.c.b16 %v1664, %v1660
    %v2073 = vpack.c.b16 %v1669, %v1665
    %v2074 = vpack.c.b16 %v1670, %v1666
    %v2075 = vpack.c.b16 %v1671, %v1667
    %v2076 = vpack.c.b16 %v1672, %v1668
    %v2077 = vpack.c.b16 %v1677, %v1673
    %v2078 = vpack.c.b16 %v1678, %v1674
    %v2079 = vpack.c.b16 %v1679, %v1675
    %v2080 = vpack.c.b16 %v1680, %v1676
    %v2081 = vpack.c.b16 %v1685, %v1681
    %v2082 = vpack.c.b16 %v1686, %v1682
    %v2083 = vpack.c.b16 %v1687, %v1683
    %v2084 = vpack.c.b16 %v1688, %v1684
    %v2085 = vpack.c.b16 %v1693, %v1689
    %v2086 = vpack.c.b16 %v1694, %v1690
    %v2087 = vpack.c.b16 %v1695, %v1691
    %v2088 = vpack.c.b16 %v1696, %v1692
    %v2089 = vpack.c.b16 %v1701, %v1697
    %v2090 = vpack.c.b16 %v1702, %v1698
    %v2091 = vpack.c.b16 %v1703, %v1699
    %v2092 = vpack.c.b16 %v1704, %v1700
    %v2093 = vpack.c.b16 %v1709, %v1705
    %v2094 = vpack.c.b16 %v1710, %v1706
    %v2095 = vpack.c.b16 %v1711, %v1707
    %v2096 = vpack.c.b16 %v1712, %v1708
    %2481 = vmatpush.bf16.msra.mxu0 %v1741
    %2482 = vmatpush.bf16.msra.mxu0 %v1737
    %2483 = vmatpush.bf16.msra.mxu0 %v1733
    %2484 = vmatpush.bf16.msra.mxu0 %v1729
    %2485 = vmatpush.bf16.msra.mxu0 %v1725
    %2486 = vmatpush.bf16.msra.mxu0 %v1721
    %2487 = vmatpush.bf16.msra.mxu0 %v1717
    %2488 = vmatpush.bf16.msra.mxu0 %v1713
    %2489 = vmatmul.bf16.gmra.mxu0 %v537
    %v2490 = vpop.f32.mrf.mxu0
    %v2491 = vadd.f32 %v493, %v2490
    %v2492 = vpop.f32.mrf.mxu0
    %v2493 = vadd.f32 %v493, %v2492
    %2494 = vdwg.mxu0
    %2495 = vmatpush.bf16.msra.mxu0 %v1773
    %2496 = vmatpush.bf16.msra.mxu0 %v1769
    %2497 = vmatpush.bf16.msra.mxu0 %v1765
    %2498 = vmatpush.bf16.msra.mxu0 %v1761
    %2499 = vmatpush.bf16.msra.mxu0 %v1757
    %2500 = vmatpush.bf16.msra.mxu0 %v1753
    %2501 = vmatpush.bf16.msra.mxu0 %v1749
    %2502 = vmatpush.bf16.msra.mxu0 %v1745
    %2503 = vmatmul.bf16.gmra.mxu0 %v538
    %v2504 = vpop.f32.mrf.mxu0
    %v2505 = vadd.f32 %v2491, %v2504
    %v2506 = vpop.f32.mrf.mxu0
    %v2507 = vadd.f32 %v2493, %v2506
    %2508 = vdwg.mxu0
    %2509 = vmatpush.bf16.msra.mxu0 %v1805
    %2510 = vmatpush.bf16.msra.mxu0 %v1801
    %2511 = vmatpush.bf16.msra.mxu0 %v1797
    %2512 = vmatpush.bf16.msra.mxu0 %v1793
    %2513 = vmatpush.bf16.msra.mxu0 %v1789
    %2514 = vmatpush.bf16.msra.mxu0 %v1785
    %2515 = vmatpush.bf16.msra.mxu0 %v1781
    %2516 = vmatpush.bf16.msra.mxu0 %v1777
    %2517 = vmatmul.bf16.gmra.mxu0 %v539
    %v2518 = vpop.f32.mrf.mxu0
    %v2519 = vadd.f32 %v2505, %v2518
    %v2520 = vpop.f32.mrf.mxu0
    %v2521 = vadd.f32 %v2507, %v2520
    %2522 = vdwg.mxu0
    %2523 = vmatpush.bf16.msra.mxu0 %v1837
    %2524 = vmatpush.bf16.msra.mxu0 %v1833
    %2525 = vmatpush.bf16.msra.mxu0 %v1829
    %2526 = vmatpush.bf16.msra.mxu0 %v1825
    %2527 = vmatpush.bf16.msra.mxu0 %v1821
    %2528 = vmatpush.bf16.msra.mxu0 %v1817
    %2529 = vmatpush.bf16.msra.mxu0 %v1813
    %2530 = vmatpush.bf16.msra.mxu0 %v1809
    %2531 = vmatmul.bf16.gmra.mxu0 %v540
    %v2532 = vpop.f32.mrf.mxu0
    %v2533 = vadd.f32 %v2519, %v2532
    %v2534 = vpop.f32.mrf.mxu0
    %v2535 = vadd.f32 %v2521, %v2534
    %2536 = vdwg.mxu0
    %2537 = vmatpush.bf16.msra.mxu0 %v1869
    %2538 = vmatpush.bf16.msra.mxu0 %v1865
    %2539 = vmatpush.bf16.msra.mxu0 %v1861
    %2540 = vmatpush.bf16.msra.mxu0 %v1857
    %2541 = vmatpush.bf16.msra.mxu0 %v1853
    %2542 = vmatpush.bf16.msra.mxu0 %v1849
    %2543 = vmatpush.bf16.msra.mxu0 %v1845
    %2544 = vmatpush.bf16.msra.mxu0 %v1841
    %2545 = vmatmul.bf16.gmra.mxu0 %v541
    %v2546 = vpop.f32.mrf.mxu0
    %v2547 = vadd.f32 %v2533, %v2546
    %v2548 = vpop.f32.mrf.mxu0
    %v2549 = vadd.f32 %v2535, %v2548
    %2550 = vdwg.mxu0
    %2551 = vmatpush.bf16.msra.mxu0 %v1901
    %2552 = vmatpush.bf16.msra.mxu0 %v1897
    %2553 = vmatpush.bf16.msra.mxu0 %v1893
    %2554 = vmatpush.bf16.msra.mxu0 %v1889
    %2555 = vmatpush.bf16.msra.mxu0 %v1885
    %2556 = vmatpush.bf16.msra.mxu0 %v1881
    %2557 = vmatpush.bf16.msra.mxu0 %v1877
    %2558 = vmatpush.bf16.msra.mxu0 %v1873
    %2559 = vmatmul.bf16.gmra.mxu0 %v542
    %v2560 = vpop.f32.mrf.mxu0
    %v2561 = vadd.f32 %v2547, %v2560
    %v2562 = vpop.f32.mrf.mxu0
    %v2563 = vadd.f32 %v2549, %v2562
    %2564 = vdwg.mxu0
    %2565 = vmatpush.bf16.msra.mxu0 %v1933
    %2566 = vmatpush.bf16.msra.mxu0 %v1929
    %2567 = vmatpush.bf16.msra.mxu0 %v1925
    %2568 = vmatpush.bf16.msra.mxu0 %v1921
    %2569 = vmatpush.bf16.msra.mxu0 %v1917
    %2570 = vmatpush.bf16.msra.mxu0 %v1913
    %2571 = vmatpush.bf16.msra.mxu0 %v1909
    %2572 = vmatpush.bf16.msra.mxu0 %v1905
    %2573 = vmatmul.bf16.gmra.mxu0 %v543
    %v2574 = vpop.f32.mrf.mxu0
    %v2575 = vadd.f32 %v2561, %v2574
    %v2576 = vpop.f32.mrf.mxu0
    %v2577 = vadd.f32 %v2563, %v2576
    %2578 = vdwg.mxu0
    %2579 = vmatpush.bf16.msra.mxu0 %v1965
    %2580 = vmatpush.bf16.msra.mxu0 %v1961
    %2581 = vmatpush.bf16.msra.mxu0 %v1957
    %2582 = vmatpush.bf16.msra.mxu0 %v1953
    %2583 = vmatpush.bf16.msra.mxu0 %v1949
    %2584 = vmatpush.bf16.msra.mxu0 %v1945
    %2585 = vmatpush.bf16.msra.mxu0 %v1941
    %2586 = vmatpush.bf16.msra.mxu0 %v1937
    %2587 = vmatmul.bf16.gmra.mxu0 %v544
    %v2588 = vpop.f32.mrf.mxu0
    %v2589 = vadd.f32 %v2575, %v2588
    %v2590 = vpop.f32.mrf.mxu0
    %v2591 = vadd.f32 %v2577, %v2590
    %2592 = vdwg.mxu0
    %2593 = vmatpush.bf16.msra.mxu0 %v1997
    %2594 = vmatpush.bf16.msra.mxu0 %v1993
    %2595 = vmatpush.bf16.msra.mxu0 %v1989
    %2596 = vmatpush.bf16.msra.mxu0 %v1985
    %2597 = vmatpush.bf16.msra.mxu0 %v1981
    %2598 = vmatpush.bf16.msra.mxu0 %v1977
    %2599 = vmatpush.bf16.msra.mxu0 %v1973
    %2600 = vmatpush.bf16.msra.mxu0 %v1969
    %2601 = vmatmul.bf16.gmra.mxu0 %v545
    %v2602 = vpop.f32.mrf.mxu0
    %v2603 = vadd.f32 %v2589, %v2602
    %v2604 = vpop.f32.mrf.mxu0
    %v2605 = vadd.f32 %v2591, %v2604
    %2606 = vdwg.mxu0
    %2607 = vmatpush.bf16.msra.mxu0 %v2029
    %2608 = vmatpush.bf16.msra.mxu0 %v2025
    %2609 = vmatpush.bf16.msra.mxu0 %v2021
    %2610 = vmatpush.bf16.msra.mxu0 %v2017
    %2611 = vmatpush.bf16.msra.mxu0 %v2013
    %2612 = vmatpush.bf16.msra.mxu0 %v2009
    %2613 = vmatpush.bf16.msra.mxu0 %v2005
    %2614 = vmatpush.bf16.msra.mxu0 %v2001
    %2615 = vmatmul.bf16.gmra.mxu0 %v546
    %v2616 = vpop.f32.mrf.mxu0
    %v2617 = vadd.f32 %v2603, %v2616
    %v2618 = vpop.f32.mrf.mxu0
    %v2619 = vadd.f32 %v2605, %v2618
    %2620 = vdwg.mxu0
    %2621 = vmatpush.bf16.msra.mxu0 %v2061
    %2622 = vmatpush.bf16.msra.mxu0 %v2057
    %2623 = vmatpush.bf16.msra.mxu0 %v2053
    %2624 = vmatpush.bf16.msra.mxu0 %v2049
    %2625 = vmatpush.bf16.msra.mxu0 %v2045
    %2626 = vmatpush.bf16.msra.mxu0 %v2041
    %2627 = vmatpush.bf16.msra.mxu0 %v2037
    %2628 = vmatpush.bf16.msra.mxu0 %v2033
    %2629 = vmatmul.bf16.gmra.mxu0 %v547
    %v2630 = vpop.f32.mrf.mxu0
    %v2631 = vadd.f32 %v2617, %v2630
    %v2632 = vpop.f32.mrf.mxu0
    %v2633 = vadd.f32 %v2619, %v2632
    %2634 = vdwg.mxu0
    %2635 = vmatpush.bf16.msra.mxu0 %v2093
    %2636 = vmatpush.bf16.msra.mxu0 %v2089
    %2637 = vmatpush.bf16.msra.mxu0 %v2085
    %2638 = vmatpush.bf16.msra.mxu0 %v2081
    %2639 = vmatpush.bf16.msra.mxu0 %v2077
    %2640 = vmatpush.bf16.msra.mxu0 %v2073
    %2641 = vmatpush.bf16.msra.mxu0 %v2069
    %2642 = vmatpush.bf16.msra.mxu0 %v2065
    %2643 = vmatmul.bf16.gmra.mxu0 %v548
    %v2644 = vpop.f32.mrf.mxu0
    %v2645 = vadd.f32 %v2631, %v2644
    %v2646 = vpop.f32.mrf.mxu0
    %v2647 = vadd.f32 %v2633, %v2646
    %2648 = vdwg.mxu0
    %2649 = vmatpush.bf16.msra.mxu0 %v1742
    %2650 = vmatpush.bf16.msra.mxu0 %v1738
    %2651 = vmatpush.bf16.msra.mxu0 %v1734
    %2652 = vmatpush.bf16.msra.mxu0 %v1730
    %2653 = vmatpush.bf16.msra.mxu0 %v1726
    %2654 = vmatpush.bf16.msra.mxu0 %v1722
    %2655 = vmatpush.bf16.msra.mxu0 %v1718
    %2656 = vmatpush.bf16.msra.mxu0 %v1714
    %2657 = vmatmul.bf16.gmra.mxu0 %v537
    %v2658 = vpop.f32.mrf.mxu0
    %v2659 = vadd.f32 %v494, %v2658
    %v2660 = vpop.f32.mrf.mxu0
    %v2661 = vadd.f32 %v494, %v2660
    %2662 = vdwg.mxu0
    %2663 = vmatpush.bf16.msra.mxu0 %v1774
    %2664 = vmatpush.bf16.msra.mxu0 %v1770
    %2665 = vmatpush.bf16.msra.mxu0 %v1766
    %2666 = vmatpush.bf16.msra.mxu0 %v1762
    %2667 = vmatpush.bf16.msra.mxu0 %v1758
    %2668 = vmatpush.bf16.msra.mxu0 %v1754
    %2669 = vmatpush.bf16.msra.mxu0 %v1750
    %2670 = vmatpush.bf16.msra.mxu0 %v1746
    %2671 = vmatmul.bf16.gmra.mxu0 %v538
    %v2672 = vpop.f32.mrf.mxu0
    %v2673 = vadd.f32 %v2659, %v2672
    %v2674 = vpop.f32.mrf.mxu0
    %v2675 = vadd.f32 %v2661, %v2674
    %2676 = vdwg.mxu0
    %2677 = vmatpush.bf16.msra.mxu0 %v1806
    %2678 = vmatpush.bf16.msra.mxu0 %v1802
    %2679 = vmatpush.bf16.msra.mxu0 %v1798
    %2680 = vmatpush.bf16.msra.mxu0 %v1794
    %2681 = vmatpush.bf16.msra.mxu0 %v1790
    %2682 = vmatpush.bf16.msra.mxu0 %v1786
    %2683 = vmatpush.bf16.msra.mxu0 %v1782
    %2684 = vmatpush.bf16.msra.mxu0 %v1778
    %2685 = vmatmul.bf16.gmra.mxu0 %v539
    %v2686 = vpop.f32.mrf.mxu0
    %v2687 = vadd.f32 %v2673, %v2686
    %v2688 = vpop.f32.mrf.mxu0
    %v2689 = vadd.f32 %v2675, %v2688
    %2690 = vdwg.mxu0
    %2691 = vmatpush.bf16.msra.mxu0 %v1838
    %2692 = vmatpush.bf16.msra.mxu0 %v1834
    %2693 = vmatpush.bf16.msra.mxu0 %v1830
    %2694 = vmatpush.bf16.msra.mxu0 %v1826
    %2695 = vmatpush.bf16.msra.mxu0 %v1822
    %2696 = vmatpush.bf16.msra.mxu0 %v1818
    %2697 = vmatpush.bf16.msra.mxu0 %v1814
    %2698 = vmatpush.bf16.msra.mxu0 %v1810
    %2699 = vmatmul.bf16.gmra.mxu0 %v540
    %v2700 = vpop.f32.mrf.mxu0
    %v2701 = vadd.f32 %v2687, %v2700
    %v2702 = vpop.f32.mrf.mxu0
    %v2703 = vadd.f32 %v2689, %v2702
    %2704 = vdwg.mxu0
    %2705 = vmatpush.bf16.msra.mxu0 %v1870
    %2706 = vmatpush.bf16.msra.mxu0 %v1866
    %2707 = vmatpush.bf16.msra.mxu0 %v1862
    %2708 = vmatpush.bf16.msra.mxu0 %v1858
    %2709 = vmatpush.bf16.msra.mxu0 %v1854
    %2710 = vmatpush.bf16.msra.mxu0 %v1850
    %2711 = vmatpush.bf16.msra.mxu0 %v1846
    %2712 = vmatpush.bf16.msra.mxu0 %v1842
    %2713 = vmatmul.bf16.gmra.mxu0 %v541
    %v2714 = vpop.f32.mrf.mxu0
    %v2715 = vadd.f32 %v2701, %v2714
    %v2716 = vpop.f32.mrf.mxu0
    %v2717 = vadd.f32 %v2703, %v2716
    %2718 = vdwg.mxu0
    %2719 = vmatpush.bf16.msra.mxu0 %v1902
    %2720 = vmatpush.bf16.msra.mxu0 %v1898
    %2721 = vmatpush.bf16.msra.mxu0 %v1894
    %2722 = vmatpush.bf16.msra.mxu0 %v1890
    %2723 = vmatpush.bf16.msra.mxu0 %v1886
    %2724 = vmatpush.bf16.msra.mxu0 %v1882
    %2725 = vmatpush.bf16.msra.mxu0 %v1878
    %2726 = vmatpush.bf16.msra.mxu0 %v1874
    %2727 = vmatmul.bf16.gmra.mxu0 %v542
    %v2728 = vpop.f32.mrf.mxu0
    %v2729 = vadd.f32 %v2715, %v2728
    %v2730 = vpop.f32.mrf.mxu0
    %v2731 = vadd.f32 %v2717, %v2730
    %2732 = vdwg.mxu0
    %2733 = vmatpush.bf16.msra.mxu0 %v1934
    %2734 = vmatpush.bf16.msra.mxu0 %v1930
    %2735 = vmatpush.bf16.msra.mxu0 %v1926
    %2736 = vmatpush.bf16.msra.mxu0 %v1922
    %2737 = vmatpush.bf16.msra.mxu0 %v1918
    %2738 = vmatpush.bf16.msra.mxu0 %v1914
    %2739 = vmatpush.bf16.msra.mxu0 %v1910
    %2740 = vmatpush.bf16.msra.mxu0 %v1906
    %2741 = vmatmul.bf16.gmra.mxu0 %v543
    %v2742 = vpop.f32.mrf.mxu0
    %v2743 = vadd.f32 %v2729, %v2742
    %v2744 = vpop.f32.mrf.mxu0
    %v2745 = vadd.f32 %v2731, %v2744
    %2746 = vdwg.mxu0
    %2747 = vmatpush.bf16.msra.mxu0 %v1966
    %2748 = vmatpush.bf16.msra.mxu0 %v1962
    %2749 = vmatpush.bf16.msra.mxu0 %v1958
    %2750 = vmatpush.bf16.msra.mxu0 %v1954
    %2751 = vmatpush.bf16.msra.mxu0 %v1950
    %2752 = vmatpush.bf16.msra.mxu0 %v1946
    %2753 = vmatpush.bf16.msra.mxu0 %v1942
    %2754 = vmatpush.bf16.msra.mxu0 %v1938
    %2755 = vmatmul.bf16.gmra.mxu0 %v544
    %v2756 = vpop.f32.mrf.mxu0
    %v2757 = vadd.f32 %v2743, %v2756
    %v2758 = vpop.f32.mrf.mxu0
    %v2759 = vadd.f32 %v2745, %v2758
    %2760 = vdwg.mxu0
    %2761 = vmatpush.bf16.msra.mxu0 %v1998
    %2762 = vmatpush.bf16.msra.mxu0 %v1994
    %2763 = vmatpush.bf16.msra.mxu0 %v1990
    %2764 = vmatpush.bf16.msra.mxu0 %v1986
    %2765 = vmatpush.bf16.msra.mxu0 %v1982
    %2766 = vmatpush.bf16.msra.mxu0 %v1978
    %2767 = vmatpush.bf16.msra.mxu0 %v1974
    %2768 = vmatpush.bf16.msra.mxu0 %v1970
    %2769 = vmatmul.bf16.gmra.mxu0 %v545
    %v2770 = vpop.f32.mrf.mxu0
    %v2771 = vadd.f32 %v2757, %v2770
    %v2772 = vpop.f32.mrf.mxu0
    %v2773 = vadd.f32 %v2759, %v2772
    %2774 = vdwg.mxu0
    %2775 = vmatpush.bf16.msra.mxu0 %v2030
    %2776 = vmatpush.bf16.msra.mxu0 %v2026
    %2777 = vmatpush.bf16.msra.mxu0 %v2022
    %2778 = vmatpush.bf16.msra.mxu0 %v2018
    %2779 = vmatpush.bf16.msra.mxu0 %v2014
    %2780 = vmatpush.bf16.msra.mxu0 %v2010
    %2781 = vmatpush.bf16.msra.mxu0 %v2006
    %2782 = vmatpush.bf16.msra.mxu0 %v2002
    %2783 = vmatmul.bf16.gmra.mxu0 %v546
    %v2784 = vpop.f32.mrf.mxu0
    %v2785 = vadd.f32 %v2771, %v2784
    %v2786 = vpop.f32.mrf.mxu0
    %v2787 = vadd.f32 %v2773, %v2786
    %2788 = vdwg.mxu0
    %2789 = vmatpush.bf16.msra.mxu0 %v2062
    %2790 = vmatpush.bf16.msra.mxu0 %v2058
    %2791 = vmatpush.bf16.msra.mxu0 %v2054
    %2792 = vmatpush.bf16.msra.mxu0 %v2050
    %2793 = vmatpush.bf16.msra.mxu0 %v2046
    %2794 = vmatpush.bf16.msra.mxu0 %v2042
    %2795 = vmatpush.bf16.msra.mxu0 %v2038
    %2796 = vmatpush.bf16.msra.mxu0 %v2034
    %2797 = vmatmul.bf16.gmra.mxu0 %v547
    %v2798 = vpop.f32.mrf.mxu0
    %v2799 = vadd.f32 %v2785, %v2798
    %v2800 = vpop.f32.mrf.mxu0
    %v2801 = vadd.f32 %v2787, %v2800
    %2802 = vdwg.mxu0
    %2803 = vmatpush.bf16.msra.mxu0 %v2094
    %2804 = vmatpush.bf16.msra.mxu0 %v2090
    %2805 = vmatpush.bf16.msra.mxu0 %v2086
    %2806 = vmatpush.bf16.msra.mxu0 %v2082
    %2807 = vmatpush.bf16.msra.mxu0 %v2078
    %2808 = vmatpush.bf16.msra.mxu0 %v2074
    %2809 = vmatpush.bf16.msra.mxu0 %v2070
    %2810 = vmatpush.bf16.msra.mxu0 %v2066
    %2811 = vmatmul.bf16.gmra.mxu0 %v548
    %v2812 = vpop.f32.mrf.mxu0
    %v2813 = vadd.f32 %v2799, %v2812
    %v2814 = vpop.f32.mrf.mxu0
    %v2815 = vadd.f32 %v2801, %v2814
    %2816 = vdwg.mxu0
    %2817 = vmatpush.bf16.msra.mxu0 %v1743
    %2818 = vmatpush.bf16.msra.mxu0 %v1739
    %2819 = vmatpush.bf16.msra.mxu0 %v1735
    %2820 = vmatpush.bf16.msra.mxu0 %v1731
    %2821 = vmatpush.bf16.msra.mxu0 %v1727
    %2822 = vmatpush.bf16.msra.mxu0 %v1723
    %2823 = vmatpush.bf16.msra.mxu0 %v1719
    %2824 = vmatpush.bf16.msra.mxu0 %v1715
    %2825 = vmatmul.bf16.gmra.mxu0 %v537
    %v2826 = vpop.f32.mrf.mxu0
    %v2827 = vadd.f32 %v495, %v2826
    %v2828 = vpop.f32.mrf.mxu0
    %v2829 = vadd.f32 %v495, %v2828
    %2830 = vdwg.mxu0
    %2831 = vmatpush.bf16.msra.mxu0 %v1775
    %2832 = vmatpush.bf16.msra.mxu0 %v1771
    %2833 = vmatpush.bf16.msra.mxu0 %v1767
    %2834 = vmatpush.bf16.msra.mxu0 %v1763
    %2835 = vmatpush.bf16.msra.mxu0 %v1759
    %2836 = vmatpush.bf16.msra.mxu0 %v1755
    %2837 = vmatpush.bf16.msra.mxu0 %v1751
    %2838 = vmatpush.bf16.msra.mxu0 %v1747
    %2839 = vmatmul.bf16.gmra.mxu0 %v538
    %v2840 = vpop.f32.mrf.mxu0
    %v2841 = vadd.f32 %v2827, %v2840
    %v2842 = vpop.f32.mrf.mxu0
    %v2843 = vadd.f32 %v2829, %v2842
    %2844 = vdwg.mxu0
    %2845 = vmatpush.bf16.msra.mxu0 %v1807
    %2846 = vmatpush.bf16.msra.mxu0 %v1803
    %2847 = vmatpush.bf16.msra.mxu0 %v1799
    %2848 = vmatpush.bf16.msra.mxu0 %v1795
    %2849 = vmatpush.bf16.msra.mxu0 %v1791
    %2850 = vmatpush.bf16.msra.mxu0 %v1787
    %2851 = vmatpush.bf16.msra.mxu0 %v1783
    %2852 = vmatpush.bf16.msra.mxu0 %v1779
    %2853 = vmatmul.bf16.gmra.mxu0 %v539
    %v2854 = vpop.f32.mrf.mxu0
    %v2855 = vadd.f32 %v2841, %v2854
    %v2856 = vpop.f32.mrf.mxu0
    %v2857 = vadd.f32 %v2843, %v2856
    %2858 = vdwg.mxu0
    %2859 = vmatpush.bf16.msra.mxu0 %v1839
    %2860 = vmatpush.bf16.msra.mxu0 %v1835
    %2861 = vmatpush.bf16.msra.mxu0 %v1831
    %2862 = vmatpush.bf16.msra.mxu0 %v1827
    %2863 = vmatpush.bf16.msra.mxu0 %v1823
    %2864 = vmatpush.bf16.msra.mxu0 %v1819
    %2865 = vmatpush.bf16.msra.mxu0 %v1815
    %2866 = vmatpush.bf16.msra.mxu0 %v1811
    %2867 = vmatmul.bf16.gmra.mxu0 %v540
    %v2868 = vpop.f32.mrf.mxu0
    %v2869 = vadd.f32 %v2855, %v2868
    %v2870 = vpop.f32.mrf.mxu0
    %v2871 = vadd.f32 %v2857, %v2870
    %2872 = vdwg.mxu0
    %2873 = vmatpush.bf16.msra.mxu0 %v1871
    %2874 = vmatpush.bf16.msra.mxu0 %v1867
    %2875 = vmatpush.bf16.msra.mxu0 %v1863
    %2876 = vmatpush.bf16.msra.mxu0 %v1859
    %2877 = vmatpush.bf16.msra.mxu0 %v1855
    %2878 = vmatpush.bf16.msra.mxu0 %v1851
    %2879 = vmatpush.bf16.msra.mxu0 %v1847
    %2880 = vmatpush.bf16.msra.mxu0 %v1843
    %2881 = vmatmul.bf16.gmra.mxu0 %v541
    %v2882 = vpop.f32.mrf.mxu0
    %v2883 = vadd.f32 %v2869, %v2882
    %v2884 = vpop.f32.mrf.mxu0
    %v2885 = vadd.f32 %v2871, %v2884
    %2886 = vdwg.mxu0
    %2887 = vmatpush.bf16.msra.mxu0 %v1903
    %2888 = vmatpush.bf16.msra.mxu0 %v1899
    %2889 = vmatpush.bf16.msra.mxu0 %v1895
    %2890 = vmatpush.bf16.msra.mxu0 %v1891
    %2891 = vmatpush.bf16.msra.mxu0 %v1887
    %2892 = vmatpush.bf16.msra.mxu0 %v1883
    %2893 = vmatpush.bf16.msra.mxu0 %v1879
    %2894 = vmatpush.bf16.msra.mxu0 %v1875
    %2895 = vmatmul.bf16.gmra.mxu0 %v542
    %v2896 = vpop.f32.mrf.mxu0
    %v2897 = vadd.f32 %v2883, %v2896
    %v2898 = vpop.f32.mrf.mxu0
    %v2899 = vadd.f32 %v2885, %v2898
    %2900 = vdwg.mxu0
    %2901 = vmatpush.bf16.msra.mxu0 %v1935
    %2902 = vmatpush.bf16.msra.mxu0 %v1931
    %2903 = vmatpush.bf16.msra.mxu0 %v1927
    %2904 = vmatpush.bf16.msra.mxu0 %v1923
    %2905 = vmatpush.bf16.msra.mxu0 %v1919
    %2906 = vmatpush.bf16.msra.mxu0 %v1915
    %2907 = vmatpush.bf16.msra.mxu0 %v1911
    %2908 = vmatpush.bf16.msra.mxu0 %v1907
    %2909 = vmatmul.bf16.gmra.mxu0 %v543
    %v2910 = vpop.f32.mrf.mxu0
    %v2911 = vadd.f32 %v2897, %v2910
    %v2912 = vpop.f32.mrf.mxu0
    %v2913 = vadd.f32 %v2899, %v2912
    %2914 = vdwg.mxu0
    %2915 = vmatpush.bf16.msra.mxu0 %v1967
    %2916 = vmatpush.bf16.msra.mxu0 %v1963
    %2917 = vmatpush.bf16.msra.mxu0 %v1959
    %2918 = vmatpush.bf16.msra.mxu0 %v1955
    %2919 = vmatpush.bf16.msra.mxu0 %v1951
    %2920 = vmatpush.bf16.msra.mxu0 %v1947
    %2921 = vmatpush.bf16.msra.mxu0 %v1943
    %2922 = vmatpush.bf16.msra.mxu0 %v1939
    %2923 = vmatmul.bf16.gmra.mxu0 %v544
    %v2924 = vpop.f32.mrf.mxu0
    %v2925 = vadd.f32 %v2911, %v2924
    %v2926 = vpop.f32.mrf.mxu0
    %v2927 = vadd.f32 %v2913, %v2926
    %2928 = vdwg.mxu0
    %2929 = vmatpush.bf16.msra.mxu0 %v1999
    %2930 = vmatpush.bf16.msra.mxu0 %v1995
    %2931 = vmatpush.bf16.msra.mxu0 %v1991
    %2932 = vmatpush.bf16.msra.mxu0 %v1987
    %2933 = vmatpush.bf16.msra.mxu0 %v1983
    %2934 = vmatpush.bf16.msra.mxu0 %v1979
    %2935 = vmatpush.bf16.msra.mxu0 %v1975
    %2936 = vmatpush.bf16.msra.mxu0 %v1971
    %2937 = vmatmul.bf16.gmra.mxu0 %v545
    %v2938 = vpop.f32.mrf.mxu0
    %v2939 = vadd.f32 %v2925, %v2938
    %v2940 = vpop.f32.mrf.mxu0
    %v2941 = vadd.f32 %v2927, %v2940
    %2942 = vdwg.mxu0
    %2943 = vmatpush.bf16.msra.mxu0 %v2031
    %2944 = vmatpush.bf16.msra.mxu0 %v2027
    %2945 = vmatpush.bf16.msra.mxu0 %v2023
    %2946 = vmatpush.bf16.msra.mxu0 %v2019
    %2947 = vmatpush.bf16.msra.mxu0 %v2015
    %2948 = vmatpush.bf16.msra.mxu0 %v2011
    %2949 = vmatpush.bf16.msra.mxu0 %v2007
    %2950 = vmatpush.bf16.msra.mxu0 %v2003
    %2951 = vmatmul.bf16.gmra.mxu0 %v546
    %v2952 = vpop.f32.mrf.mxu0
    %v2953 = vadd.f32 %v2939, %v2952
    %v2954 = vpop.f32.mrf.mxu0
    %v2955 = vadd.f32 %v2941, %v2954
    %2956 = vdwg.mxu0
    %2957 = vmatpush.bf16.msra.mxu0 %v2063
    %2958 = vmatpush.bf16.msra.mxu0 %v2059
    %2959 = vmatpush.bf16.msra.mxu0 %v2055
    %2960 = vmatpush.bf16.msra.mxu0 %v2051
    %2961 = vmatpush.bf16.msra.mxu0 %v2047
    %2962 = vmatpush.bf16.msra.mxu0 %v2043
    %2963 = vmatpush.bf16.msra.mxu0 %v2039
    %2964 = vmatpush.bf16.msra.mxu0 %v2035
    %2965 = vmatmul.bf16.gmra.mxu0 %v547
    %v2966 = vpop.f32.mrf.mxu0
    %v2967 = vadd.f32 %v2953, %v2966
    %v2968 = vpop.f32.mrf.mxu0
    %v2969 = vadd.f32 %v2955, %v2968
    %2970 = vdwg.mxu0
    %2971 = vmatpush.bf16.msra.mxu0 %v2095
    %2972 = vmatpush.bf16.msra.mxu0 %v2091
    %2973 = vmatpush.bf16.msra.mxu0 %v2087
    %2974 = vmatpush.bf16.msra.mxu0 %v2083
    %2975 = vmatpush.bf16.msra.mxu0 %v2079
    %2976 = vmatpush.bf16.msra.mxu0 %v2075
    %2977 = vmatpush.bf16.msra.mxu0 %v2071
    %2978 = vmatpush.bf16.msra.mxu0 %v2067
    %2979 = vmatmul.bf16.gmra.mxu0 %v548
    %v2980 = vpop.f32.mrf.mxu0
    %v2981 = vadd.f32 %v2967, %v2980
    %v2982 = vpop.f32.mrf.mxu0
    %v2983 = vadd.f32 %v2969, %v2982
    %2984 = vdwg.mxu0
    %2985 = vmatpush.bf16.msra.mxu0 %v1744
    %2986 = vmatpush.bf16.msra.mxu0 %v1740
    %2987 = vmatpush.bf16.msra.mxu0 %v1736
    %2988 = vmatpush.bf16.msra.mxu0 %v1732
    %2989 = vmatpush.bf16.msra.mxu0 %v1728
    %2990 = vmatpush.bf16.msra.mxu0 %v1724
    %2991 = vmatpush.bf16.msra.mxu0 %v1720
    %2992 = vmatpush.bf16.msra.mxu0 %v1716
    %2993 = vmatmul.bf16.gmra.mxu0 %v537
    %v2994 = vpop.f32.mrf.mxu0
    %v2995 = vadd.f32 %v496, %v2994
    %v2996 = vpop.f32.mrf.mxu0
    %v2997 = vadd.f32 %v496, %v2996
    %2998 = vdwg.mxu0
    %2999 = vmatpush.bf16.msra.mxu0 %v1776
    %3000 = vmatpush.bf16.msra.mxu0 %v1772
    %3001 = vmatpush.bf16.msra.mxu0 %v1768
    %3002 = vmatpush.bf16.msra.mxu0 %v1764
    %3003 = vmatpush.bf16.msra.mxu0 %v1760
    %3004 = vmatpush.bf16.msra.mxu0 %v1756
    %3005 = vmatpush.bf16.msra.mxu0 %v1752
    %3006 = vmatpush.bf16.msra.mxu0 %v1748
    %3007 = vmatmul.bf16.gmra.mxu0 %v538
    %v3008 = vpop.f32.mrf.mxu0
    %v3009 = vadd.f32 %v2995, %v3008
    %v3010 = vpop.f32.mrf.mxu0
    %v3011 = vadd.f32 %v2997, %v3010
    %3012 = vdwg.mxu0
    %3013 = vmatpush.bf16.msra.mxu0 %v1808
    %3014 = vmatpush.bf16.msra.mxu0 %v1804
    %3015 = vmatpush.bf16.msra.mxu0 %v1800
    %3016 = vmatpush.bf16.msra.mxu0 %v1796
    %3017 = vmatpush.bf16.msra.mxu0 %v1792
    %3018 = vmatpush.bf16.msra.mxu0 %v1788
    %3019 = vmatpush.bf16.msra.mxu0 %v1784
    %3020 = vmatpush.bf16.msra.mxu0 %v1780
    %3021 = vmatmul.bf16.gmra.mxu0 %v539
    %v3022 = vpop.f32.mrf.mxu0
    %v3023 = vadd.f32 %v3009, %v3022
    %v3024 = vpop.f32.mrf.mxu0
    %v3025 = vadd.f32 %v3011, %v3024
    %3026 = vdwg.mxu0
    %3027 = vmatpush.bf16.msra.mxu0 %v1840
    %3028 = vmatpush.bf16.msra.mxu0 %v1836
    %3029 = vmatpush.bf16.msra.mxu0 %v1832
    %3030 = vmatpush.bf16.msra.mxu0 %v1828
    %3031 = vmatpush.bf16.msra.mxu0 %v1824
    %3032 = vmatpush.bf16.msra.mxu0 %v1820
    %3033 = vmatpush.bf16.msra.mxu0 %v1816
    %3034 = vmatpush.bf16.msra.mxu0 %v1812
    %3035 = vmatmul.bf16.gmra.mxu0 %v540
    %v3036 = vpop.f32.mrf.mxu0
    %v3037 = vadd.f32 %v3023, %v3036
    %v3038 = vpop.f32.mrf.mxu0
    %v3039 = vadd.f32 %v3025, %v3038
    %3040 = vdwg.mxu0
    %3041 = vmatpush.bf16.msra.mxu0 %v1872
    %3042 = vmatpush.bf16.msra.mxu0 %v1868
    %3043 = vmatpush.bf16.msra.mxu0 %v1864
    %3044 = vmatpush.bf16.msra.mxu0 %v1860
    %3045 = vmatpush.bf16.msra.mxu0 %v1856
    %3046 = vmatpush.bf16.msra.mxu0 %v1852
    %3047 = vmatpush.bf16.msra.mxu0 %v1848
    %3048 = vmatpush.bf16.msra.mxu0 %v1844
    %3049 = vmatmul.bf16.gmra.mxu0 %v541
    %v3050 = vpop.f32.mrf.mxu0
    %v3051 = vadd.f32 %v3037, %v3050
    %v3052 = vpop.f32.mrf.mxu0
    %v3053 = vadd.f32 %v3039, %v3052
    %3054 = vdwg.mxu0
    %3055 = vmatpush.bf16.msra.mxu0 %v1904
    %3056 = vmatpush.bf16.msra.mxu0 %v1900
    %3057 = vmatpush.bf16.msra.mxu0 %v1896
    %3058 = vmatpush.bf16.msra.mxu0 %v1892
    %3059 = vmatpush.bf16.msra.mxu0 %v1888
    %3060 = vmatpush.bf16.msra.mxu0 %v1884
    %3061 = vmatpush.bf16.msra.mxu0 %v1880
    %3062 = vmatpush.bf16.msra.mxu0 %v1876
    %3063 = vmatmul.bf16.gmra.mxu0 %v542
    %v3064 = vpop.f32.mrf.mxu0
    %v3065 = vadd.f32 %v3051, %v3064
    %v3066 = vpop.f32.mrf.mxu0
    %v3067 = vadd.f32 %v3053, %v3066
    %3068 = vdwg.mxu0
    %3069 = vmatpush.bf16.msra.mxu0 %v1936
    %3070 = vmatpush.bf16.msra.mxu0 %v1932
    %3071 = vmatpush.bf16.msra.mxu0 %v1928
    %3072 = vmatpush.bf16.msra.mxu0 %v1924
    %3073 = vmatpush.bf16.msra.mxu0 %v1920
    %3074 = vmatpush.bf16.msra.mxu0 %v1916
    %3075 = vmatpush.bf16.msra.mxu0 %v1912
    %3076 = vmatpush.bf16.msra.mxu0 %v1908
    %3077 = vmatmul.bf16.gmra.mxu0 %v543
    %v3078 = vpop.f32.mrf.mxu0
    %v3079 = vadd.f32 %v3065, %v3078
    %v3080 = vpop.f32.mrf.mxu0
    %v3081 = vadd.f32 %v3067, %v3080
    %3082 = vdwg.mxu0
    %3083 = vmatpush.bf16.msra.mxu0 %v1968
    %3084 = vmatpush.bf16.msra.mxu0 %v1964
    %3085 = vmatpush.bf16.msra.mxu0 %v1960
    %3086 = vmatpush.bf16.msra.mxu0 %v1956
    %3087 = vmatpush.bf16.msra.mxu0 %v1952
    %3088 = vmatpush.bf16.msra.mxu0 %v1948
    %3089 = vmatpush.bf16.msra.mxu0 %v1944
    %3090 = vmatpush.bf16.msra.mxu0 %v1940
    %3091 = vmatmul.bf16.gmra.mxu0 %v544
    %v3092 = vpop.f32.mrf.mxu0
    %v3093 = vadd.f32 %v3079, %v3092
    %v3094 = vpop.f32.mrf.mxu0
    %v3095 = vadd.f32 %v3081, %v3094
    %3096 = vdwg.mxu0
    %3097 = vmatpush.bf16.msra.mxu0 %v2000
    %3098 = vmatpush.bf16.msra.mxu0 %v1996
    %3099 = vmatpush.bf16.msra.mxu0 %v1992
    %3100 = vmatpush.bf16.msra.mxu0 %v1988
    %3101 = vmatpush.bf16.msra.mxu0 %v1984
    %3102 = vmatpush.bf16.msra.mxu0 %v1980
    %3103 = vmatpush.bf16.msra.mxu0 %v1976
    %3104 = vmatpush.bf16.msra.mxu0 %v1972
    %3105 = vmatmul.bf16.gmra.mxu0 %v545
    %v3106 = vpop.f32.mrf.mxu0
    %v3107 = vadd.f32 %v3093, %v3106
    %v3108 = vpop.f32.mrf.mxu0
    %v3109 = vadd.f32 %v3095, %v3108
    %3110 = vdwg.mxu0
    %3111 = vmatpush.bf16.msra.mxu0 %v2032
    %3112 = vmatpush.bf16.msra.mxu0 %v2028
    %3113 = vmatpush.bf16.msra.mxu0 %v2024
    %3114 = vmatpush.bf16.msra.mxu0 %v2020
    %3115 = vmatpush.bf16.msra.mxu0 %v2016
    %3116 = vmatpush.bf16.msra.mxu0 %v2012
    %3117 = vmatpush.bf16.msra.mxu0 %v2008
    %3118 = vmatpush.bf16.msra.mxu0 %v2004
    %3119 = vmatmul.bf16.gmra.mxu0 %v546
    %v3120 = vpop.f32.mrf.mxu0
    %v3121 = vadd.f32 %v3107, %v3120
    %v3122 = vpop.f32.mrf.mxu0
    %v3123 = vadd.f32 %v3109, %v3122
    %3124 = vdwg.mxu0
    %3125 = vmatpush.bf16.msra.mxu0 %v2064
    %3126 = vmatpush.bf16.msra.mxu0 %v2060
    %3127 = vmatpush.bf16.msra.mxu0 %v2056
    %3128 = vmatpush.bf16.msra.mxu0 %v2052
    %3129 = vmatpush.bf16.msra.mxu0 %v2048
    %3130 = vmatpush.bf16.msra.mxu0 %v2044
    %3131 = vmatpush.bf16.msra.mxu0 %v2040
    %3132 = vmatpush.bf16.msra.mxu0 %v2036
    %3133 = vmatmul.bf16.gmra.mxu0 %v547
    %v3134 = vpop.f32.mrf.mxu0
    %v3135 = vadd.f32 %v3121, %v3134
    %v3136 = vpop.f32.mrf.mxu0
    %v3137 = vadd.f32 %v3123, %v3136
    %3138 = vdwg.mxu0
    %3139 = vmatpush.bf16.msra.mxu0 %v2096
    %3140 = vmatpush.bf16.msra.mxu0 %v2092
    %3141 = vmatpush.bf16.msra.mxu0 %v2088
    %3142 = vmatpush.bf16.msra.mxu0 %v2084
    %3143 = vmatpush.bf16.msra.mxu0 %v2080
    %3144 = vmatpush.bf16.msra.mxu0 %v2076
    %3145 = vmatpush.bf16.msra.mxu0 %v2072
    %3146 = vmatpush.bf16.msra.mxu0 %v2068
    %3147 = vmatmul.bf16.gmra.mxu0 %v548
    %v3148 = vpop.f32.mrf.mxu0
    %v3149 = vadd.f32 %v3135, %v3148
    %v3150 = vpop.f32.mrf.mxu0
    %v3151 = vadd.f32 %v3137, %v3150
    %3152 = vdwg.mxu0
    %v3153 = vtanh.pop %v2645
    %v3154 = vtanh.pop %v2813
    %v3155 = vtanh.pop %v2981
    %v3156 = vtanh.pop %v3149
    %v3157 = vtanh.pop %v2647
    %v3158 = vtanh.pop %v2815
    %v3159 = vtanh.pop %v2983
    %v3160 = vtanh.pop %v3151
    %v3161 = vpack.c.bf16 %v3157, %v3153
    %v3162 = vpack.c.bf16 %v3158, %v3154
    %v3163 = vpack.c.bf16 %v3159, %v3155
    %v3164 = vpack.c.bf16 %v3160, %v3156
    %v3165 = vld [vmem:[#allocation8] sm:$0xf]
    %v3166 = vld [vmem:[#allocation8 + $0x4] sm:$0xf]
    %v3167 = vld [vmem:[#allocation8 + $0x8] sm:$0xf]
    %v3168 = vld [vmem:[#allocation8 + $0xc] sm:$0xf]
    %v3169 = vld [vmem:[#allocation8 + $0x10] sm:$0xf]
    %v3170 = vld [vmem:[#allocation8 + $0x14] sm:$0xf]
    %v3171 = vld [vmem:[#allocation8 + $0x18] sm:$0xf]
    %v3172 = vld [vmem:[#allocation8 + $0x1c] sm:$0xf]
    %v3173 = vld [vmem:[#allocation8 + $0x20] sm:$0xf]
    %v3174 = vld [vmem:[#allocation8 + $0x24] sm:$0xf]
    %v3175 = vld [vmem:[#allocation8 + $0x28] sm:$0xf]
    %v3176 = vld [vmem:[#allocation8 + $0x2c] sm:$0xf]
    %v3177 = vld [vmem:[#allocation8 + $0x30] sm:$0xf]
    %v3178 = vld [vmem:[#allocation8 + $0x34] sm:$0xf]
    %v3179 = vld [vmem:[#allocation8 + $0x38] sm:$0xf]
    %v3180 = vld [vmem:[#allocation8 + $0x3c] sm:$0xf]
    %v3181 = vld [vmem:[#allocation8 + $0x40] sm:$0xf]
    %v3182 = vld [vmem:[#allocation8 + $0x44] sm:$0xf]
    %v3183 = vld [vmem:[#allocation8 + $0x48] sm:$0xf]
    %v3184 = vld [vmem:[#allocation8 + $0x4c] sm:$0xf]
    %v3185 = vld [vmem:[#allocation8 + $0x50] sm:$0xf]
    %v3186 = vld [vmem:[#allocation8 + $0x54] sm:$0xf]
    %v3187 = vld [vmem:[#allocation8 + $0x58] sm:$0xf]
    %v3188 = vld [vmem:[#allocation8 + $0x5c] sm:$0xf]
    %v3189 = vld [vmem:[#allocation8 + $0x60] sm:$0xf]
    %v3190 = vld [vmem:[#allocation8 + $0x64] sm:$0xf]
    %v3191 = vld [vmem:[#allocation8 + $0x68] sm:$0xf]
    %v3192 = vld [vmem:[#allocation8 + $0x6c] sm:$0xf]
    %v3193 = vld [vmem:[#allocation8 + $0x70] sm:$0xf]
    %v3194 = vld [vmem:[#allocation8 + $0x74] sm:$0xf]
    %v3195 = vld [vmem:[#allocation8 + $0x78] sm:$0xf]
    %v3196 = vld [vmem:[#allocation8 + $0x7c] sm:$0xf]
    %v3197 = vld [vmem:[#allocation8 + $0x80] sm:$0xf]
    %v3198 = vld [vmem:[#allocation8 + $0x84] sm:$0xf]
    %v3199 = vld [vmem:[#allocation8 + $0x88] sm:$0xf]
    %v3200 = vld [vmem:[#allocation8 + $0x8c] sm:$0xf]
    %v3201 = vld [vmem:[#allocation8 + $0x90] sm:$0xf]
    %v3202 = vld [vmem:[#allocation8 + $0x94] sm:$0xf]
    %v3203 = vld [vmem:[#allocation8 + $0x98] sm:$0xf]
    %v3204 = vld [vmem:[#allocation8 + $0x9c] sm:$0xf]
    %v3205 = vld [vmem:[#allocation8 + $0xa0] sm:$0xf]
    %v3206 = vld [vmem:[#allocation8 + $0xa4] sm:$0xf]
    %v3207 = vld [vmem:[#allocation8 + $0xa8] sm:$0xf]
    %v3208 = vld [vmem:[#allocation8 + $0xac] sm:$0xf]
    %v3209 = vld [vmem:[#allocation8 + $0xb0] sm:$0xf]
    %v3210 = vld [vmem:[#allocation8 + $0xb4] sm:$0xf]
    %v3211 = vld [vmem:[#allocation8 + $0xb8] sm:$0xf]
    %v3212 = vld [vmem:[#allocation8 + $0xbc] sm:$0xf]
    %v3213 = vld [vmem:[#allocation8 + $0xc0] sm:$0xf]
    %v3214 = vld [vmem:[#allocation8 + $0xc4] sm:$0xf]
    %v3215 = vld [vmem:[#allocation8 + $0xc8] sm:$0xf]
    %v3216 = vld [vmem:[#allocation8 + $0xcc] sm:$0xf]
    %v3217 = vld [vmem:[#allocation8 + $0xd0] sm:$0xf]
    %v3218 = vld [vmem:[#allocation8 + $0xd4] sm:$0xf]
    %v3219 = vld [vmem:[#allocation8 + $0xd8] sm:$0xf]
    %v3220 = vld [vmem:[#allocation8 + $0xdc] sm:$0xf]
    %v3221 = vld [vmem:[#allocation8 + $0xe0] sm:$0xf]
    %v3222 = vld [vmem:[#allocation8 + $0xe4] sm:$0xf]
    %v3223 = vld [vmem:[#allocation8 + $0xe8] sm:$0xf]
    %v3224 = vld [vmem:[#allocation8 + $0xec] sm:$0xf]
    %v3225 = vld [vmem:[#allocation8 + $0xf0] sm:$0xf]
    %v3226 = vld [vmem:[#allocation8 + $0xf4] sm:$0xf]
    %v3227 = vld [vmem:[#allocation8 + $0xf8] sm:$0xf]
    %v3228 = vld [vmem:[#allocation8 + $0xfc] sm:$0xf]
    %v3229 = vld [vmem:[#allocation10] sm:$0x1]
    %v3231 = vperm.slane %v3229, 0
    %v3297 = vunpack.c.l.b16 %v3165
    %v3298 = vunpack.c.l.b16 %v3166
    %v3299 = vunpack.c.l.b16 %v3167
    %v3300 = vunpack.c.l.b16 %v3168
    %v3301 = vunpack.c.l.b16 %v3169
    %v3302 = vunpack.c.l.b16 %v3170
    %v3303 = vunpack.c.l.b16 %v3171
    %v3304 = vunpack.c.l.b16 %v3172
    %v3305 = vunpack.c.l.b16 %v3173
    %v3306 = vunpack.c.l.b16 %v3174
    %v3307 = vunpack.c.l.b16 %v3175
    %v3308 = vunpack.c.l.b16 %v3176
    %v3309 = vunpack.c.l.b16 %v3177
    %v3310 = vunpack.c.l.b16 %v3178
    %v3311 = vunpack.c.l.b16 %v3179
    %v3312 = vunpack.c.l.b16 %v3180
    %v3313 = vunpack.c.l.b16 %v3181
    %v3314 = vunpack.c.l.b16 %v3182
    %v3315 = vunpack.c.l.b16 %v3183
    %v3316 = vunpack.c.l.b16 %v3184
    %v3317 = vunpack.c.l.b16 %v3185
    %v3318 = vunpack.c.l.b16 %v3186
    %v3319 = vunpack.c.l.b16 %v3187
    %v3320 = vunpack.c.l.b16 %v3188
    %v3321 = vunpack.c.l.b16 %v3189
    %v3322 = vunpack.c.l.b16 %v3190
    %v3323 = vunpack.c.l.b16 %v3191
    %v3324 = vunpack.c.l.b16 %v3192
    %v3325 = vunpack.c.l.b16 %v3193
    %v3326 = vunpack.c.l.b16 %v3194
    %v3327 = vunpack.c.l.b16 %v3195
    %v3328 = vunpack.c.l.b16 %v3196
    %v3329 = vunpack.c.l.b16 %v3197
    %v3330 = vunpack.c.l.b16 %v3198
    %v3331 = vunpack.c.l.b16 %v3199
    %v3332 = vunpack.c.l.b16 %v3200
    %v3333 = vunpack.c.l.b16 %v3201
    %v3334 = vunpack.c.l.b16 %v3202
    %v3335 = vunpack.c.l.b16 %v3203
    %v3336 = vunpack.c.l.b16 %v3204
    %v3337 = vunpack.c.l.b16 %v3205
    %v3338 = vunpack.c.l.b16 %v3206
    %v3339 = vunpack.c.l.b16 %v3207
    %v3340 = vunpack.c.l.b16 %v3208
    %v3341 = vunpack.c.l.b16 %v3209
    %v3342 = vunpack.c.l.b16 %v3210
    %v3343 = vunpack.c.l.b16 %v3211
    %v3344 = vunpack.c.l.b16 %v3212
    %v3345 = vunpack.c.l.b16 %v3213
    %v3346 = vunpack.c.l.b16 %v3214
    %v3347 = vunpack.c.l.b16 %v3215
    %v3348 = vunpack.c.l.b16 %v3216
    %v3349 = vunpack.c.l.b16 %v3217
    %v3350 = vunpack.c.l.b16 %v3218
    %v3351 = vunpack.c.l.b16 %v3219
    %v3352 = vunpack.c.l.b16 %v3220
    %v3353 = vunpack.c.l.b16 %v3221
    %v3354 = vunpack.c.l.b16 %v3222
    %v3355 = vunpack.c.l.b16 %v3223
    %v3356 = vunpack.c.l.b16 %v3224
    %v3357 = vunpack.c.l.b16 %v3225
    %v3358 = vunpack.c.l.b16 %v3226
    %v3359 = vunpack.c.l.b16 %v3227
    %v3360 = vunpack.c.l.b16 %v3228
    %v3361 = vpack.c.b16 %v3298, %v3297
    %v3362 = vpack.c.b16 %v3300, %v3299
    %v3363 = vpack.c.b16 %v3302, %v3301
    %v3364 = vpack.c.b16 %v3304, %v3303
    %v3365 = vpack.c.b16 %v3306, %v3305
    %v3366 = vpack.c.b16 %v3308, %v3307
    %v3367 = vpack.c.b16 %v3310, %v3309
    %v3368 = vpack.c.b16 %v3312, %v3311
    %v3369 = vpack.c.b16 %v3314, %v3313
    %v3370 = vpack.c.b16 %v3316, %v3315
    %v3371 = vpack.c.b16 %v3318, %v3317
    %v3372 = vpack.c.b16 %v3320, %v3319
    %v3373 = vpack.c.b16 %v3322, %v3321
    %v3374 = vpack.c.b16 %v3324, %v3323
    %v3375 = vpack.c.b16 %v3326, %v3325
    %v3376 = vpack.c.b16 %v3328, %v3327
    %v3377 = vpack.c.b16 %v3330, %v3329
    %v3378 = vpack.c.b16 %v3332, %v3331
    %v3379 = vpack.c.b16 %v3334, %v3333
    %v3380 = vpack.c.b16 %v3336, %v3335
    %v3381 = vpack.c.b16 %v3338, %v3337
    %v3382 = vpack.c.b16 %v3340, %v3339
    %v3383 = vpack.c.b16 %v3342, %v3341
    %v3384 = vpack.c.b16 %v3344, %v3343
    %v3385 = vpack.c.b16 %v3346, %v3345
    %v3386 = vpack.c.b16 %v3348, %v3347
    %v3387 = vpack.c.b16 %v3350, %v3349
    %v3388 = vpack.c.b16 %v3352, %v3351
    %v3389 = vpack.c.b16 %v3354, %v3353
    %v3390 = vpack.c.b16 %v3356, %v3355
    %v3391 = vpack.c.b16 %v3358, %v3357
    %v3392 = vpack.c.b16 %v3360, %v3359
    %3425 = vmatpush.bf16.msra.mxu0 %v3368
    %3426 = vmatpush.bf16.msra.mxu0 %v3367
    %3427 = vmatpush.bf16.msra.mxu0 %v3366
    %3428 = vmatpush.bf16.msra.mxu0 %v3365
    %3429 = vmatpush.bf16.msra.mxu0 %v3364
    %3430 = vmatpush.bf16.msra.mxu0 %v3363
    %3431 = vmatpush.bf16.msra.mxu0 %v3362
    %3432 = vmatpush.bf16.msra.mxu0 %v3361
    %3433 = vmatmul.bf16.gmra.mxu0 %v3161
    %v3434 = vpop.f32.mrf.mxu0
    %v3435 = vadd.f32 %v3231, %v3434
    %v3436 = vpop.f32.mrf.mxu0
    %v3437 = vadd.f32 %v3231, %v3436
    %3438 = vdwg.mxu0
    %3439 = vmatpush.bf16.msra.mxu0 %v3376
    %3440 = vmatpush.bf16.msra.mxu0 %v3375
    %3441 = vmatpush.bf16.msra.mxu0 %v3374
    %3442 = vmatpush.bf16.msra.mxu0 %v3373
    %3443 = vmatpush.bf16.msra.mxu0 %v3372
    %3444 = vmatpush.bf16.msra.mxu0 %v3371
    %3445 = vmatpush.bf16.msra.mxu0 %v3370
    %3446 = vmatpush.bf16.msra.mxu0 %v3369
    %3447 = vmatmul.bf16.gmra.mxu0 %v3162
    %v3448 = vpop.f32.mrf.mxu0
    %v3449 = vadd.f32 %v3435, %v3448
    %v3450 = vpop.f32.mrf.mxu0
    %v3451 = vadd.f32 %v3437, %v3450
    %3452 = vdwg.mxu0
    %3453 = vmatpush.bf16.msra.mxu0 %v3384
    %3454 = vmatpush.bf16.msra.mxu0 %v3383
    %3455 = vmatpush.bf16.msra.mxu0 %v3382
    %3456 = vmatpush.bf16.msra.mxu0 %v3381
    %3457 = vmatpush.bf16.msra.mxu0 %v3380
    %3458 = vmatpush.bf16.msra.mxu0 %v3379
    %3459 = vmatpush.bf16.msra.mxu0 %v3378
    %3460 = vmatpush.bf16.msra.mxu0 %v3377
    %3461 = vmatmul.bf16.gmra.mxu0 %v3163
    %v3462 = vpop.f32.mrf.mxu0
    %v3463 = vadd.f32 %v3449, %v3462
    %v3464 = vpop.f32.mrf.mxu0
    %v3465 = vadd.f32 %v3451, %v3464
    %3466 = vdwg.mxu0
    %3467 = vmatpush.bf16.msra.mxu0 %v3392
    %3468 = vmatpush.bf16.msra.mxu0 %v3391
    %3469 = vmatpush.bf16.msra.mxu0 %v3390
    %3470 = vmatpush.bf16.msra.mxu0 %v3389
    %3471 = vmatpush.bf16.msra.mxu0 %v3388
    %3472 = vmatpush.bf16.msra.mxu0 %v3387
    %3473 = vmatpush.bf16.msra.mxu0 %v3386
    %3474 = vmatpush.bf16.msra.mxu0 %v3385
    %3475 = vmatmul.bf16.gmra.mxu0 %v3164
    %v3476 = vpop.f32.mrf.mxu0
    %v3477 = vadd.f32 %v3463, %v3476
    %v3478 = vpop.f32.mrf.mxu0
    %v3479 = vadd.f32 %v3465, %v3478
    %3480 = vdwg.mxu0
    %v3481 = vtanh.pop %v3477
    %v3482 = vtanh.pop %v3479
    %3483 = vst [vmem:[#allocation11] sm:$0xff] %v3481
    %3484 = vst [vmem:[#allocation11 + $0x8] sm:$0xff] %v3482
    // Predicated region
    $region42: #{tpu_custom_call.1} parent=1 // pred_check
      _
    $region43: #{tpu_custom_call.1} parent=1 // pred_check_branch
      %3486 = sbr.rel (0) target = $region45
    $region44: #{tpu_custom_call.1} parent=1 // pred_region
      %3488 = vsyncadd [#allocation4], 0
      %s3489 = sshll.u32 [#allocation11], 4
      %s3490 = int_to_ptr.vmem [resolvable:$true] %s3489
      %s3491 = sshll.u32 %s5, 4
      %s3492 = int_to_ptr.hbm [resolvable:$true] %s3491
      %3497 = dma.vmem_to_hbm [thread:$0]  %s3490, 256, %s3492, [#allocation4], 128, 128, 8
    $region45: #{tpu_custom_call.1} parent=1 // pred_fallthru
      _
    // Predicated region
    $region46: #{tpu_custom_call.1} parent=1 // pred_check
      _
    $region47: #{tpu_custom_call.1} parent=1 // pred_check_branch
      %3499 = sbr.rel (0) target = $region49
    $region48: #{tpu_custom_call.1} parent=1 // pred_region
      %3501 = dma.done [#allocation4], 256
    $region49: #{tpu_custom_call.1} parent=1 // pred_fallthru
      _
    %3502 = vsyncpa [#allocation3], 1
    %3503 = vsyncpa [#allocation6], 1
    %3504 = vsyncpa [#allocation9], 1
    %3505 = vsyncpa [#allocation4], 1

</llo_original>
